<compile_context>
chip_gen: v5e
topology: v5e:2x2
jax: 0.10.0
libtpu: 0.0.40
codegen_flags: <defaults>
</compile_context>

<pallas_src>
import math
from functools import partial

import jax
import jax.numpy as jnp
from jax.experimental import pallas as pl
from jax.experimental.pallas import tpu as pltpu

# ----------------------------- model config ---------------------------------
NUM_LABELS = 10          # len(TOPICS)
HIDDEN = 32              # synthetic "bert.config.hidden_size"
NUM_HEADS = 2
HEAD_DIM = HIDDEN // NUM_HEADS
INTERMEDIATE = 64
NUM_LAYERS = 2
VOCAB = 100
MAX_POS = 16
LN_EPS = 1e-12
OUT_PAD = 128            # lane-dense classifier output width (sliced to 10)


# --------------------------- in-kernel helpers -------------------------------
def _gelu(x):
    # tanh-approximation GELU (elementwise, VPU/EUP).
    # TODO(synk): HF BERT default is the exact erf GELU; tanh approx used here.
    c = math.sqrt(2.0 / math.pi)
    return 0.5 * x * (1.0 + jnp.tanh(c * (x + 0.044715 * x * x * x)))


def _sigmoid(x):
    # numerically-stable sigmoid (no inf intermediates on the selected branch)
    return jnp.where(x >= 0.0,
                     1.0 / (1.0 + jnp.exp(-x)),
                     jnp.exp(x) / (1.0 + jnp.exp(x)))


def _ln(x, g, b, eps=LN_EPS):
    mu = jnp.mean(x, axis=-1, keepdims=True)
    var = jnp.mean(jnp.square(x - mu), axis=-1, keepdims=True)
    return (x - mu) * jax.lax.rsqrt(var + eps) * g + b


# ------------------------------ fused kernel ---------------------------------
def _forward_kernel(*refs, num_layers, seq):
    """One grid step == one batch element, entire forward in VMEM."""
    emb_ref, mask_ref, emb_g_ref, emb_b_ref = refs[:4]
    o_ref = refs[-1]
    rest = refs[4:-1]
    layer_refs = [rest[i * 12:(i + 1) * 12] for i in range(num_layers)]
    pool_w_ref, pool_b_ref, fc_w_ref, fc_b_ref = rest[num_layers * 12:]

    scale = 1.0 / math.sqrt(HEAD_DIM)
    mask = mask_ref[0]                                    # (1, S) additive bias
    h = _ln(emb_ref[0], emb_g_ref[...], emb_b_ref[...])   # (S, H)

    for (wqkv_r, bqkv_r, wo_r, bo_r, g1_r, b1_r,
         wi_r, bi_r, wo2_r, bo2_r, g2_r, b2_r) in layer_refs:
        # ---- self-attention: fused QKV projection, one MXU pass ----
        qkv = jnp.dot(h, wqkv_r[...],
                      preferred_element_type=jnp.float32) + bqkv_r[...]  # (S,3H)
        wo_v = wo_r[...]
        attn = jnp.zeros((seq, HIDDEN), jnp.float32)
        for hd in range(NUM_HEADS):
            lo = hd * HEAD_DIM
            q = qkv[:, lo:lo + HEAD_DIM]                           # (S, Dh)
            k = qkv[:, HIDDEN + lo:HIDDEN + lo + HEAD_DIM]         # (S, Dh)
            v = qkv[:, 2 * HIDDEN + lo:2 * HIDDEN + lo + HEAD_DIM]  # (S, Dh)
            # q . k^T via dot_general contracting last dims (no transpose)
            s = jax.lax.dot_general(
                q, k, (((1,), (1,)), ((), ())),
                preferred_element_type=jnp.float32)                # (S, S)
            s = s * scale + mask
            s = s - jnp.max(s, axis=-1, keepdims=True)
            p = jnp.exp(s)
            p = p / jnp.sum(p, axis=-1, keepdims=True)
            ctx = jnp.dot(p, v, preferred_element_type=jnp.float32)   # (S, Dh)
            # fold the per-head output projection directly into the accumulator
            attn = attn + jnp.dot(ctx, wo_v[lo:lo + HEAD_DIM, :],
                                  preferred_element_type=jnp.float32)  # (S, H)
        attn = attn + bo_r[...]
        h = _ln(h + attn, g1_r[...], b1_r[...])          # residual + LN1

        # ---- FFN with GELU, residual + LN2 (all fused) ----
        ffn = jnp.dot(h, wi_r[...],
                      preferred_element_type=jnp.float32) + bi_r[...]
        ffn = _gelu(ffn)
        ffn = jnp.dot(ffn, wo2_r[...],
                      preferred_element_type=jnp.float32) + bo2_r[...]
        h = _ln(h + ffn, g2_r[...], b2_r[...])

    # ---- pooler (tanh on [CLS]) + classifier head (sigmoid), lane-padded ----
    cls = h[0:1, :]                                               # (1, H)
    pooled = jnp.tanh(jnp.dot(cls, pool_w_ref[...],
                              preferred_element_type=jnp.float32)
                      + pool_b_ref[...])                          # (1, H)
    # Dropout(0.1) is identity at inference time.
    logits = jnp.dot(pooled, fc_w_ref[...],
                     preferred_element_type=jnp.float32) + fc_b_ref[...]  # (1,128)
    o_ref[0] = _sigmoid(logits)


# ----------------------------- parameter init -------------------------------
def init_params(key):
    def nrm(k, shape, scale=0.02):
        return scale * jax.random.normal(k, shape, dtype=jnp.float32)

    keys = iter(jax.random.split(key, 64))
    p = {
        "word_emb": nrm(next(keys), (VOCAB, HIDDEN)),
        "pos_emb": nrm(next(keys), (MAX_POS, HIDDEN)),
        "type_emb": nrm(next(keys), (2, HIDDEN)),
        "emb_ln_g": jnp.ones((1, HIDDEN), jnp.float32),
        "emb_ln_b": jnp.zeros((1, HIDDEN), jnp.float32),
        "layers": [],
        "pool_w": nrm(next(keys), (HIDDEN, HIDDEN)),
        "pool_b": jnp.zeros((1, HIDDEN), jnp.float32),
        "fc_w": nrm(next(keys), (HIDDEN, NUM_LABELS)),
        "fc_b": jnp.zeros((1, NUM_LABELS), jnp.float32),
    }
    for _ in range(NUM_LAYERS):
        p["layers"].append({
            "wqkv": nrm(next(keys), (HIDDEN, 3 * HIDDEN)),   # Q|K|V fused
            "bqkv": jnp.zeros((1, 3 * HIDDEN), jnp.float32),
            "wo": nrm(next(keys), (HIDDEN, HIDDEN)),
            "bo": jnp.zeros((1, HIDDEN), jnp.float32),
            "ln1_g": jnp.ones((1, HIDDEN), jnp.float32),
            "ln1_b": jnp.zeros((1, HIDDEN), jnp.float32),
            "wi": nrm(next(keys), (HIDDEN, INTERMEDIATE)),
            "bi": jnp.zeros((1, INTERMEDIATE), jnp.float32),
            "wo2": nrm(next(keys), (INTERMEDIATE, HIDDEN)),
            "bo2": jnp.zeros((1, HIDDEN), jnp.float32),
            "ln2_g": jnp.ones((1, HIDDEN), jnp.float32),
            "ln2_b": jnp.zeros((1, HIDDEN), jnp.float32),
        })
    return p


# ----------------------------- forward wrapper -------------------------------
def bert_topic_classifier_forward(params, input_ids, attention_mask):
    """input_ids: [B, S] int32; attention_mask: [B, S] (1 = keep, 0 = pad)."""
    B, S = input_ids.shape

    # Embedding gather (glue, plain JAX).  Token-type 0 for all positions.
    word = jnp.take(params["word_emb"], input_ids, axis=0)          # [B,S,H]
    pos = params["pos_emb"][:S][None, :, :]                         # [1,S,H]
    typ = params["type_emb"][0][None, None, :]                      # [1,1,H]
    emb = (word + pos + typ).astype(jnp.float32)                    # [B,S,H]

    # Additive attention-mask bias over key positions.
    mask_bias = ((1.0 - attention_mask.astype(jnp.float32)) * -1e9
                 ).reshape(B, 1, S)                                 # [B,1,S]

    # Lane-dense classifier weights: pad N from NUM_LABELS to 128.
    fc_w_p = jnp.pad(params["fc_w"], ((0, 0), (0, OUT_PAD - NUM_LABELS)))
    fc_b_p = jnp.pad(params["fc_b"], ((0, 0), (0, OUT_PAD - NUM_LABELS)))

    flat_inputs = [emb, mask_bias, params["emb_ln_g"], params["emb_ln_b"]]
    for lp in params["layers"]:
        flat_inputs += [lp["wqkv"], lp["bqkv"], lp["wo"], lp["bo"],
                        lp["ln1_g"], lp["ln1_b"], lp["wi"], lp["bi"],
                        lp["wo2"], lp["bo2"], lp["ln2_g"], lp["ln2_b"]]
    flat_inputs += [params["pool_w"], params["pool_b"], fc_w_p, fc_b_p]

    in_specs = [
        pl.BlockSpec((1, S, HIDDEN), lambda b: (b, 0, 0)),   # embeddings, per batch
        pl.BlockSpec((1, 1, S), lambda b: (b, 0, 0)),        # mask bias, per batch
    ]
    # all weights / biases: full-array blocks, resident across the grid
    for x in flat_inputs[2:]:
        in_specs.append(pl.BlockSpec(x.shape, lambda b: (0, 0)))

    out_padded = pl.pallas_call(
        partial(_forward_kernel, num_layers=NUM_LAYERS, seq=S),
        out_shape=jax.ShapeDtypeStruct((B, 1, OUT_PAD), jnp.float32),
        grid=(B,),
        in_specs=in_specs,
        out_specs=pl.BlockSpec((1, 1, OUT_PAD), lambda b: (b, 0, 0)),
        compiler_params=pltpu.CompilerParams(
            dimension_semantics=("parallel",)),
    )(*flat_inputs)

    return out_padded[:, 0, :NUM_LABELS]                            # [B, 10]


# --------------------------------- main --------------------------------------
if __name__ == "__main__":
    B, S = 2, 8
    root = jax.random.PRNGKey(0)
    k_param, k_ids = jax.random.split(root)

    params = init_params(k_param)
    input_ids = jax.random.randint(k_ids, (B, S), 0, VOCAB, dtype=jnp.int32)
    attention_mask = jnp.array(
        [[1, 1, 1, 1, 1, 1, 1, 1],
         [1, 1, 1, 1, 1, 0, 0, 0]], dtype=jnp.int32)

    out = bert_topic_classifier_forward(params, input_ids, attention_mask)
    out = jax.block_until_ready(out)
    assert out.shape == (B, NUM_LABELS)
    assert bool(jnp.all((out >= 0.0) & (out <= 1.0)))
    print("KERNEL_OK")
</pallas_src>

<mosaic_0001>
module attributes {stable_mosaic.version = 11 : i64} {
  func.func @_forward_kernel(%arg0: i32, %arg1: memref<1x8x32xf32, #tpu.memory_space<vmem>>, %arg2: memref<1x1x8xf32, #tpu.memory_space<vmem>>, %arg3: memref<1x32xf32, #tpu.memory_space<vmem>>, %arg4: memref<1x32xf32, #tpu.memory_space<vmem>>, %arg5: memref<32x96xf32, #tpu.memory_space<vmem>>, %arg6: memref<1x96xf32, #tpu.memory_space<vmem>>, %arg7: memref<32x32xf32, #tpu.memory_space<vmem>>, %arg8: memref<1x32xf32, #tpu.memory_space<vmem>>, %arg9: memref<1x32xf32, #tpu.memory_space<vmem>>, %arg10: memref<1x32xf32, #tpu.memory_space<vmem>>, %arg11: memref<32x64xf32, #tpu.memory_space<vmem>>, %arg12: memref<1x64xf32, #tpu.memory_space<vmem>>, %arg13: memref<64x32xf32, #tpu.memory_space<vmem>>, %arg14: memref<1x32xf32, #tpu.memory_space<vmem>>, %arg15: memref<1x32xf32, #tpu.memory_space<vmem>>, %arg16: memref<1x32xf32, #tpu.memory_space<vmem>>, %arg17: memref<32x96xf32, #tpu.memory_space<vmem>>, %arg18: memref<1x96xf32, #tpu.memory_space<vmem>>, %arg19: memref<32x32xf32, #tpu.memory_space<vmem>>, %arg20: memref<1x32xf32, #tpu.memory_space<vmem>>, %arg21: memref<1x32xf32, #tpu.memory_space<vmem>>, %arg22: memref<1x32xf32, #tpu.memory_space<vmem>>, %arg23: memref<32x64xf32, #tpu.memory_space<vmem>>, %arg24: memref<1x64xf32, #tpu.memory_space<vmem>>, %arg25: memref<64x32xf32, #tpu.memory_space<vmem>>, %arg26: memref<1x32xf32, #tpu.memory_space<vmem>>, %arg27: memref<1x32xf32, #tpu.memory_space<vmem>>, %arg28: memref<1x32xf32, #tpu.memory_space<vmem>>, %arg29: memref<32x32xf32, #tpu.memory_space<vmem>>, %arg30: memref<1x32xf32, #tpu.memory_space<vmem>>, %arg31: memref<32x128xf32, #tpu.memory_space<vmem>>, %arg32: memref<1x128xf32, #tpu.memory_space<vmem>>, %arg33: memref<1x1x128xf32, #tpu.memory_space<vmem>>) attributes {dimension_semantics = [#tpu.dimension_semantics<parallel>], iteration_bounds = array<i64: 2>, scalar_prefetch = 0 : i64, scratch_operands = 0 : i64, tpu.core_type = #tpu.core_type<tc>, window_params = [{transform_indices = @transform_0, window_bounds = array<i64: 1, 8, 32>}, {transform_indices = @transform_1, window_bounds = array<i64: 1, 1, 8>}, {pipeline_mode = #tpu.pipeline_mode<synchronous>, transform_indices = @transform_2, window_bounds = array<i64: 1, 32>}, {pipeline_mode = #tpu.pipeline_mode<synchronous>, transform_indices = @transform_3, window_bounds = array<i64: 1, 32>}, {pipeline_mode = #tpu.pipeline_mode<synchronous>, transform_indices = @transform_4, window_bounds = array<i64: 32, 96>}, {pipeline_mode = #tpu.pipeline_mode<synchronous>, transform_indices = @transform_5, window_bounds = array<i64: 1, 96>}, {pipeline_mode = #tpu.pipeline_mode<synchronous>, transform_indices = @transform_6, window_bounds = array<i64: 32, 32>}, {pipeline_mode = #tpu.pipeline_mode<synchronous>, transform_indices = @transform_7, window_bounds = array<i64: 1, 32>}, {pipeline_mode = #tpu.pipeline_mode<synchronous>, transform_indices = @transform_8, window_bounds = array<i64: 1, 32>}, {pipeline_mode = #tpu.pipeline_mode<synchronous>, transform_indices = @transform_9, window_bounds = array<i64: 1, 32>}, {pipeline_mode = #tpu.pipeline_mode<synchronous>, transform_indices = @transform_10, window_bounds = array<i64: 32, 64>}, {pipeline_mode = #tpu.pipeline_mode<synchronous>, transform_indices = @transform_11, window_bounds = array<i64: 1, 64>}, {pipeline_mode = #tpu.pipeline_mode<synchronous>, transform_indices = @transform_12, window_bounds = array<i64: 64, 32>}, {pipeline_mode = #tpu.pipeline_mode<synchronous>, transform_indices = @transform_13, window_bounds = array<i64: 1, 32>}, {pipeline_mode = #tpu.pipeline_mode<synchronous>, transform_indices = @transform_14, window_bounds = array<i64: 1, 32>}, {pipeline_mode = #tpu.pipeline_mode<synchronous>, transform_indices = @transform_15, window_bounds = array<i64: 1, 32>}, {pipeline_mode = #tpu.pipeline_mode<synchronous>, transform_indices = @transform_16, window_bounds = array<i64: 32, 96>}, {pipeline_mode = #tpu.pipeline_mode<synchronous>, transform_indices = @transform_17, window_bounds = array<i64: 1, 96>}, {pipeline_mode = #tpu.pipeline_mode<synchronous>, transform_indices = @transform_18, window_bounds = array<i64: 32, 32>}, {pipeline_mode = #tpu.pipeline_mode<synchronous>, transform_indices = @transform_19, window_bounds = array<i64: 1, 32>}, {pipeline_mode = #tpu.pipeline_mode<synchronous>, transform_indices = @transform_20, window_bounds = array<i64: 1, 32>}, {pipeline_mode = #tpu.pipeline_mode<synchronous>, transform_indices = @transform_21, window_bounds = array<i64: 1, 32>}, {pipeline_mode = #tpu.pipeline_mode<synchronous>, transform_indices = @transform_22, window_bounds = array<i64: 32, 64>}, {pipeline_mode = #tpu.pipeline_mode<synchronous>, transform_indices = @transform_23, window_bounds = array<i64: 1, 64>}, {pipeline_mode = #tpu.pipeline_mode<synchronous>, transform_indices = @transform_24, window_bounds = array<i64: 64, 32>}, {pipeline_mode = #tpu.pipeline_mode<synchronous>, transform_indices = @transform_25, window_bounds = array<i64: 1, 32>}, {pipeline_mode = #tpu.pipeline_mode<synchronous>, transform_indices = @transform_26, window_bounds = array<i64: 1, 32>}, {pipeline_mode = #tpu.pipeline_mode<synchronous>, transform_indices = @transform_27, window_bounds = array<i64: 1, 32>}, {pipeline_mode = #tpu.pipeline_mode<synchronous>, transform_indices = @transform_28, window_bounds = array<i64: 32, 32>}, {pipeline_mode = #tpu.pipeline_mode<synchronous>, transform_indices = @transform_29, window_bounds = array<i64: 1, 32>}, {pipeline_mode = #tpu.pipeline_mode<synchronous>, transform_indices = @transform_30, window_bounds = array<i64: 32, 128>}, {pipeline_mode = #tpu.pipeline_mode<synchronous>, transform_indices = @transform_31, window_bounds = array<i64: 1, 128>}, {transform_indices = @transform_32, window_bounds = array<i64: 1, 1, 128>}]} {
    %c0 = arith.constant 0 : index
    %c0_0 = arith.constant 0 : index
    %c0_1 = arith.constant 0 : index
    %0 = vector.load %arg2[%c0, %c0_0, %c0_1] : memref<1x1x8xf32, #tpu.memory_space<vmem>>, vector<1x1x8xf32>
    %1 = vector.shape_cast %0 : vector<1x1x8xf32> to vector<1x8xf32>
    %c0_2 = arith.constant 0 : index
    %c0_3 = arith.constant 0 : index
    %c0_4 = arith.constant 0 : index
    %2 = vector.load %arg1[%c0_2, %c0_3, %c0_4] : memref<1x8x32xf32, #tpu.memory_space<vmem>>, vector<1x8x32xf32>
    %3 = vector.shape_cast %2 : vector<1x8x32xf32> to vector<8x32xf32>
    %c0_5 = arith.constant 0 : index
    %c0_6 = arith.constant 0 : index
    %4 = vector.load %arg3[%c0_5, %c0_6] : memref<1x32xf32, #tpu.memory_space<vmem>>, vector<1x32xf32>
    %c0_7 = arith.constant 0 : index
    %c0_8 = arith.constant 0 : index
    %5 = vector.load %arg4[%c0_7, %c0_8] : memref<1x32xf32, #tpu.memory_space<vmem>>, vector<1x32xf32>
    %cst = arith.constant dense<0.000000e+00> : vector<8xf32>
    %6 = vector.multi_reduction <add>, %3, %cst [1] : vector<8x32xf32> to vector<8xf32>
    %7 = vector.shape_cast %6 : vector<8xf32> to vector<8x1xf32>
    %cst_9 = arith.constant 3.200000e+01 : f32
    %8 = vector.broadcast %cst_9 : f32 to vector<8x1xf32>
    %9 = arith.divf %7, %8 : vector<8x1xf32>
    %10 = vector.broadcast %9 : vector<8x1xf32> to vector<8x32xf32>
    %11 = arith.subf %3, %10 : vector<8x32xf32>
    %12 = arith.mulf %11, %11 : vector<8x32xf32>
    %cst_10 = arith.constant dense<0.000000e+00> : vector<8xf32>
    %13 = vector.multi_reduction <add>, %12, %cst_10 [1] : vector<8x32xf32> to vector<8xf32>
    %14 = vector.shape_cast %13 : vector<8xf32> to vector<8x1xf32>
    %cst_11 = arith.constant 3.200000e+01 : f32
    %15 = vector.broadcast %cst_11 : f32 to vector<8x1xf32>
    %16 = arith.divf %14, %15 : vector<8x1xf32>
    %17 = vector.broadcast %9 : vector<8x1xf32> to vector<8x32xf32>
    %18 = arith.subf %3, %17 : vector<8x32xf32>
    %cst_12 = arith.constant 9.99999996E-13 : f32
    %19 = vector.broadcast %cst_12 : f32 to vector<8x1xf32>
    %20 = arith.addf %16, %19 : vector<8x1xf32>
    %21 = math.rsqrt %20 : vector<8x1xf32>
    %22 = vector.broadcast %21 : vector<8x1xf32> to vector<8x32xf32>
    %23 = arith.mulf %18, %22 : vector<8x32xf32>
    %24 = vector.broadcast %4 : vector<1x32xf32> to vector<8x32xf32>
    %25 = arith.mulf %23, %24 : vector<8x32xf32>
    %26 = vector.broadcast %5 : vector<1x32xf32> to vector<8x32xf32>
    %27 = arith.addf %25, %26 : vector<8x32xf32>
    %c0_13 = arith.constant 0 : index
    %c0_14 = arith.constant 0 : index
    %28 = vector.load %arg5[%c0_13, %c0_14] : memref<32x96xf32, #tpu.memory_space<vmem>>, vector<32x96xf32>
    %cst_15 = arith.constant dense<0.000000e+00> : vector<8x96xf32>
    %29 = tpu.matmul %27, %28, %cst_15 {dimension_numbers = #tpu.dot_dimension_numbers<[1], [0], [0], [1], [0, 0, 1, 1], [], []>} : vector<8x32xf32>, vector<32x96xf32>, vector<8x96xf32> -> vector<8x96xf32>
    %c0_16 = arith.constant 0 : index
    %c0_17 = arith.constant 0 : index
    %30 = vector.load %arg6[%c0_16, %c0_17] : memref<1x96xf32, #tpu.memory_space<vmem>>, vector<1x96xf32>
    %31 = vector.broadcast %30 : vector<1x96xf32> to vector<8x96xf32>
    %32 = arith.addf %29, %31 : vector<8x96xf32>
    %c0_18 = arith.constant 0 : index
    %c0_19 = arith.constant 0 : index
    %33 = vector.load %arg7[%c0_18, %c0_19] : memref<32x32xf32, #tpu.memory_space<vmem>>, vector<32x32xf32>
    %cst_20 = arith.constant 0.000000e+00 : f32
    %34 = vector.broadcast %cst_20 : f32 to vector<8x32xf32>
    %35 = vector.extract_strided_slice %32 {offsets = [0, 0], sizes = [8, 16], strides = [1, 1]} : vector<8x96xf32> to vector<8x16xf32>
    %36 = vector.extract_strided_slice %32 {offsets = [0, 32], sizes = [8, 16], strides = [1, 1]} : vector<8x96xf32> to vector<8x16xf32>
    %37 = vector.extract_strided_slice %32 {offsets = [0, 64], sizes = [8, 16], strides = [1, 1]} : vector<8x96xf32> to vector<8x16xf32>
    %cst_21 = arith.constant dense<0.000000e+00> : vector<8x8xf32>
    %38 = tpu.matmul %35, %36, %cst_21 {dimension_numbers = #tpu.dot_dimension_numbers<[1], [1], [0], [0], [0, 0, 1, 0], [], []>} : vector<8x16xf32>, vector<8x16xf32>, vector<8x8xf32> -> vector<8x8xf32>
    %cst_22 = arith.constant 2.500000e-01 : f32
    %39 = vector.broadcast %cst_22 : f32 to vector<8x8xf32>
    %40 = arith.mulf %38, %39 : vector<8x8xf32>
    %41 = vector.broadcast %1 : vector<1x8xf32> to vector<8x8xf32>
    %42 = arith.addf %40, %41 : vector<8x8xf32>
    %cst_23 = arith.constant dense<0xFF800000> : vector<8xf32>
    %43 = vector.multi_reduction <maximumf>, %42, %cst_23 [1] : vector<8x8xf32> to vector<8xf32>
    %44 = vector.shape_cast %43 : vector<8xf32> to vector<8x1xf32>
    %45 = vector.broadcast %44 : vector<8x1xf32> to vector<8x8xf32>
    %46 = arith.subf %42, %45 : vector<8x8xf32>
    %47 = math.exp %46 : vector<8x8xf32>
    %cst_24 = arith.constant dense<0.000000e+00> : vector<8xf32>
    %48 = vector.multi_reduction <add>, %47, %cst_24 [1] : vector<8x8xf32> to vector<8xf32>
    %49 = vector.shape_cast %48 : vector<8xf32> to vector<8x1xf32>
    %50 = vector.broadcast %49 : vector<8x1xf32> to vector<8x8xf32>
    %51 = arith.divf %47, %50 : vector<8x8xf32>
    %cst_25 = arith.constant dense<0.000000e+00> : vector<8x16xf32>
    %52 = tpu.matmul %51, %37, %cst_25 {dimension_numbers = #tpu.dot_dimension_numbers<[1], [0], [0], [1], [0, 0, 1, 1], [], []>} : vector<8x8xf32>, vector<8x16xf32>, vector<8x16xf32> -> vector<8x16xf32>
    %53 = vector.extract_strided_slice %33 {offsets = [0, 0], sizes = [16, 32], strides = [1, 1]} : vector<32x32xf32> to vector<16x32xf32>
    %cst_26 = arith.constant dense<0.000000e+00> : vector<8x32xf32>
    %54 = tpu.matmul %52, %53, %cst_26 {dimension_numbers = #tpu.dot_dimension_numbers<[1], [0], [0], [1], [0, 0, 1, 1], [], []>} : vector<8x16xf32>, vector<16x32xf32>, vector<8x32xf32> -> vector<8x32xf32>
    %55 = arith.addf %34, %54 : vector<8x32xf32>
    %56 = vector.extract_strided_slice %32 {offsets = [0, 16], sizes = [8, 16], strides = [1, 1]} : vector<8x96xf32> to vector<8x16xf32>
    %57 = vector.extract_strided_slice %32 {offsets = [0, 48], sizes = [8, 16], strides = [1, 1]} : vector<8x96xf32> to vector<8x16xf32>
    %58 = vector.extract_strided_slice %32 {offsets = [0, 80], sizes = [8, 16], strides = [1, 1]} : vector<8x96xf32> to vector<8x16xf32>
    %cst_27 = arith.constant dense<0.000000e+00> : vector<8x8xf32>
    %59 = tpu.matmul %56, %57, %cst_27 {dimension_numbers = #tpu.dot_dimension_numbers<[1], [1], [0], [0], [0, 0, 1, 0], [], []>} : vector<8x16xf32>, vector<8x16xf32>, vector<8x8xf32> -> vector<8x8xf32>
    %cst_28 = arith.constant 2.500000e-01 : f32
    %60 = vector.broadcast %cst_28 : f32 to vector<8x8xf32>
    %61 = arith.mulf %59, %60 : vector<8x8xf32>
    %62 = vector.broadcast %1 : vector<1x8xf32> to vector<8x8xf32>
    %63 = arith.addf %61, %62 : vector<8x8xf32>
    %cst_29 = arith.constant dense<0xFF800000> : vector<8xf32>
    %64 = vector.multi_reduction <maximumf>, %63, %cst_29 [1] : vector<8x8xf32> to vector<8xf32>
    %65 = vector.shape_cast %64 : vector<8xf32> to vector<8x1xf32>
    %66 = vector.broadcast %65 : vector<8x1xf32> to vector<8x8xf32>
    %67 = arith.subf %63, %66 : vector<8x8xf32>
    %68 = math.exp %67 : vector<8x8xf32>
    %cst_30 = arith.constant dense<0.000000e+00> : vector<8xf32>
    %69 = vector.multi_reduction <add>, %68, %cst_30 [1] : vector<8x8xf32> to vector<8xf32>
    %70 = vector.shape_cast %69 : vector<8xf32> to vector<8x1xf32>
    %71 = vector.broadcast %70 : vector<8x1xf32> to vector<8x8xf32>
    %72 = arith.divf %68, %71 : vector<8x8xf32>
    %cst_31 = arith.constant dense<0.000000e+00> : vector<8x16xf32>
    %73 = tpu.matmul %72, %58, %cst_31 {dimension_numbers = #tpu.dot_dimension_numbers<[1], [0], [0], [1], [0, 0, 1, 1], [], []>} : vector<8x8xf32>, vector<8x16xf32>, vector<8x16xf32> -> vector<8x16xf32>
    %74 = vector.extract_strided_slice %33 {offsets = [16, 0], sizes = [16, 32], strides = [1, 1]} : vector<32x32xf32> to vector<16x32xf32>
    %cst_32 = arith.constant dense<0.000000e+00> : vector<8x32xf32>
    %75 = tpu.matmul %73, %74, %cst_32 {dimension_numbers = #tpu.dot_dimension_numbers<[1], [0], [0], [1], [0, 0, 1, 1], [], []>} : vector<8x16xf32>, vector<16x32xf32>, vector<8x32xf32> -> vector<8x32xf32>
    %76 = arith.addf %55, %75 : vector<8x32xf32>
    %c0_33 = arith.constant 0 : index
    %c0_34 = arith.constant 0 : index
    %77 = vector.load %arg8[%c0_33, %c0_34] : memref<1x32xf32, #tpu.memory_space<vmem>>, vector<1x32xf32>
    %78 = vector.broadcast %77 : vector<1x32xf32> to vector<8x32xf32>
    %79 = arith.addf %76, %78 : vector<8x32xf32>
    %80 = arith.addf %27, %79 : vector<8x32xf32>
    %c0_35 = arith.constant 0 : index
    %c0_36 = arith.constant 0 : index
    %81 = vector.load %arg9[%c0_35, %c0_36] : memref<1x32xf32, #tpu.memory_space<vmem>>, vector<1x32xf32>
    %c0_37 = arith.constant 0 : index
    %c0_38 = arith.constant 0 : index
    %82 = vector.load %arg10[%c0_37, %c0_38] : memref<1x32xf32, #tpu.memory_space<vmem>>, vector<1x32xf32>
    %cst_39 = arith.constant dense<0.000000e+00> : vector<8xf32>
    %83 = vector.multi_reduction <add>, %80, %cst_39 [1] : vector<8x32xf32> to vector<8xf32>
    %84 = vector.shape_cast %83 : vector<8xf32> to vector<8x1xf32>
    %cst_40 = arith.constant 3.200000e+01 : f32
    %85 = vector.broadcast %cst_40 : f32 to vector<8x1xf32>
    %86 = arith.divf %84, %85 : vector<8x1xf32>
    %87 = vector.broadcast %86 : vector<8x1xf32> to vector<8x32xf32>
    %88 = arith.subf %80, %87 : vector<8x32xf32>
    %89 = arith.mulf %88, %88 : vector<8x32xf32>
    %cst_41 = arith.constant dense<0.000000e+00> : vector<8xf32>
    %90 = vector.multi_reduction <add>, %89, %cst_41 [1] : vector<8x32xf32> to vector<8xf32>
    %91 = vector.shape_cast %90 : vector<8xf32> to vector<8x1xf32>
    %cst_42 = arith.constant 3.200000e+01 : f32
    %92 = vector.broadcast %cst_42 : f32 to vector<8x1xf32>
    %93 = arith.divf %91, %92 : vector<8x1xf32>
    %94 = vector.broadcast %86 : vector<8x1xf32> to vector<8x32xf32>
    %95 = arith.subf %80, %94 : vector<8x32xf32>
    %cst_43 = arith.constant 9.99999996E-13 : f32
    %96 = vector.broadcast %cst_43 : f32 to vector<8x1xf32>
    %97 = arith.addf %93, %96 : vector<8x1xf32>
    %98 = math.rsqrt %97 : vector<8x1xf32>
    %99 = vector.broadcast %98 : vector<8x1xf32> to vector<8x32xf32>
    %100 = arith.mulf %95, %99 : vector<8x32xf32>
    %101 = vector.broadcast %81 : vector<1x32xf32> to vector<8x32xf32>
    %102 = arith.mulf %100, %101 : vector<8x32xf32>
    %103 = vector.broadcast %82 : vector<1x32xf32> to vector<8x32xf32>
    %104 = arith.addf %102, %103 : vector<8x32xf32>
    %c0_44 = arith.constant 0 : index
    %c0_45 = arith.constant 0 : index
    %105 = vector.load %arg11[%c0_44, %c0_45] : memref<32x64xf32, #tpu.memory_space<vmem>>, vector<32x64xf32>
    %cst_46 = arith.constant dense<0.000000e+00> : vector<8x64xf32>
    %106 = tpu.matmul %104, %105, %cst_46 {dimension_numbers = #tpu.dot_dimension_numbers<[1], [0], [0], [1], [0, 0, 1, 1], [], []>} : vector<8x32xf32>, vector<32x64xf32>, vector<8x64xf32> -> vector<8x64xf32>
    %c0_47 = arith.constant 0 : index
    %c0_48 = arith.constant 0 : index
    %107 = vector.load %arg12[%c0_47, %c0_48] : memref<1x64xf32, #tpu.memory_space<vmem>>, vector<1x64xf32>
    %108 = vector.broadcast %107 : vector<1x64xf32> to vector<8x64xf32>
    %109 = arith.addf %106, %108 : vector<8x64xf32>
    %cst_49 = arith.constant 5.000000e-01 : f32
    %110 = vector.broadcast %cst_49 : f32 to vector<8x64xf32>
    %111 = arith.mulf %110, %109 : vector<8x64xf32>
    %cst_50 = arith.constant 4.471500e-02 : f32
    %112 = vector.broadcast %cst_50 : f32 to vector<8x64xf32>
    %113 = arith.mulf %112, %109 : vector<8x64xf32>
    %114 = arith.mulf %113, %109 : vector<8x64xf32>
    %115 = arith.mulf %114, %109 : vector<8x64xf32>
    %116 = arith.addf %109, %115 : vector<8x64xf32>
    %cst_51 = arith.constant 0.797884583 : f32
    %117 = vector.broadcast %cst_51 : f32 to vector<8x64xf32>
    %118 = arith.mulf %117, %116 : vector<8x64xf32>
    %119 = math.tanh %118 : vector<8x64xf32>
    %cst_52 = arith.constant 1.000000e+00 : f32
    %120 = vector.broadcast %cst_52 : f32 to vector<8x64xf32>
    %121 = arith.addf %120, %119 : vector<8x64xf32>
    %122 = arith.mulf %111, %121 : vector<8x64xf32>
    %c0_53 = arith.constant 0 : index
    %c0_54 = arith.constant 0 : index
    %123 = vector.load %arg13[%c0_53, %c0_54] : memref<64x32xf32, #tpu.memory_space<vmem>>, vector<64x32xf32>
    %cst_55 = arith.constant dense<0.000000e+00> : vector<8x32xf32>
    %124 = tpu.matmul %122, %123, %cst_55 {dimension_numbers = #tpu.dot_dimension_numbers<[1], [0], [0], [1], [0, 0, 1, 1], [], []>} : vector<8x64xf32>, vector<64x32xf32>, vector<8x32xf32> -> vector<8x32xf32>
    %c0_56 = arith.constant 0 : index
    %c0_57 = arith.constant 0 : index
    %125 = vector.load %arg14[%c0_56, %c0_57] : memref<1x32xf32, #tpu.memory_space<vmem>>, vector<1x32xf32>
    %126 = vector.broadcast %125 : vector<1x32xf32> to vector<8x32xf32>
    %127 = arith.addf %124, %126 : vector<8x32xf32>
    %128 = arith.addf %104, %127 : vector<8x32xf32>
    %c0_58 = arith.constant 0 : index
    %c0_59 = arith.constant 0 : index
    %129 = vector.load %arg15[%c0_58, %c0_59] : memref<1x32xf32, #tpu.memory_space<vmem>>, vector<1x32xf32>
    %c0_60 = arith.constant 0 : index
    %c0_61 = arith.constant 0 : index
    %130 = vector.load %arg16[%c0_60, %c0_61] : memref<1x32xf32, #tpu.memory_space<vmem>>, vector<1x32xf32>
    %cst_62 = arith.constant dense<0.000000e+00> : vector<8xf32>
    %131 = vector.multi_reduction <add>, %128, %cst_62 [1] : vector<8x32xf32> to vector<8xf32>
    %132 = vector.shape_cast %131 : vector<8xf32> to vector<8x1xf32>
    %cst_63 = arith.constant 3.200000e+01 : f32
    %133 = vector.broadcast %cst_63 : f32 to vector<8x1xf32>
    %134 = arith.divf %132, %133 : vector<8x1xf32>
    %135 = vector.broadcast %134 : vector<8x1xf32> to vector<8x32xf32>
    %136 = arith.subf %128, %135 : vector<8x32xf32>
    %137 = arith.mulf %136, %136 : vector<8x32xf32>
    %cst_64 = arith.constant dense<0.000000e+00> : vector<8xf32>
    %138 = vector.multi_reduction <add>, %137, %cst_64 [1] : vector<8x32xf32> to vector<8xf32>
    %139 = vector.shape_cast %138 : vector<8xf32> to vector<8x1xf32>
    %cst_65 = arith.constant 3.200000e+01 : f32
    %140 = vector.broadcast %cst_65 : f32 to vector<8x1xf32>
    %141 = arith.divf %139, %140 : vector<8x1xf32>
    %142 = vector.broadcast %134 : vector<8x1xf32> to vector<8x32xf32>
    %143 = arith.subf %128, %142 : vector<8x32xf32>
    %cst_66 = arith.constant 9.99999996E-13 : f32
    %144 = vector.broadcast %cst_66 : f32 to vector<8x1xf32>
    %145 = arith.addf %141, %144 : vector<8x1xf32>
    %146 = math.rsqrt %145 : vector<8x1xf32>
    %147 = vector.broadcast %146 : vector<8x1xf32> to vector<8x32xf32>
    %148 = arith.mulf %143, %147 : vector<8x32xf32>
    %149 = vector.broadcast %129 : vector<1x32xf32> to vector<8x32xf32>
    %150 = arith.mulf %148, %149 : vector<8x32xf32>
    %151 = vector.broadcast %130 : vector<1x32xf32> to vector<8x32xf32>
    %152 = arith.addf %150, %151 : vector<8x32xf32>
    %c0_67 = arith.constant 0 : index
    %c0_68 = arith.constant 0 : index
    %153 = vector.load %arg17[%c0_67, %c0_68] : memref<32x96xf32, #tpu.memory_space<vmem>>, vector<32x96xf32>
    %cst_69 = arith.constant dense<0.000000e+00> : vector<8x96xf32>
    %154 = tpu.matmul %152, %153, %cst_69 {dimension_numbers = #tpu.dot_dimension_numbers<[1], [0], [0], [1], [0, 0, 1, 1], [], []>} : vector<8x32xf32>, vector<32x96xf32>, vector<8x96xf32> -> vector<8x96xf32>
    %c0_70 = arith.constant 0 : index
    %c0_71 = arith.constant 0 : index
    %155 = vector.load %arg18[%c0_70, %c0_71] : memref<1x96xf32, #tpu.memory_space<vmem>>, vector<1x96xf32>
    %156 = vector.broadcast %155 : vector<1x96xf32> to vector<8x96xf32>
    %157 = arith.addf %154, %156 : vector<8x96xf32>
    %c0_72 = arith.constant 0 : index
    %c0_73 = arith.constant 0 : index
    %158 = vector.load %arg19[%c0_72, %c0_73] : memref<32x32xf32, #tpu.memory_space<vmem>>, vector<32x32xf32>
    %cst_74 = arith.constant 0.000000e+00 : f32
    %159 = vector.broadcast %cst_74 : f32 to vector<8x32xf32>
    %160 = vector.extract_strided_slice %157 {offsets = [0, 0], sizes = [8, 16], strides = [1, 1]} : vector<8x96xf32> to vector<8x16xf32>
    %161 = vector.extract_strided_slice %157 {offsets = [0, 32], sizes = [8, 16], strides = [1, 1]} : vector<8x96xf32> to vector<8x16xf32>
    %162 = vector.extract_strided_slice %157 {offsets = [0, 64], sizes = [8, 16], strides = [1, 1]} : vector<8x96xf32> to vector<8x16xf32>
    %cst_75 = arith.constant dense<0.000000e+00> : vector<8x8xf32>
    %163 = tpu.matmul %160, %161, %cst_75 {dimension_numbers = #tpu.dot_dimension_numbers<[1], [1], [0], [0], [0, 0, 1, 0], [], []>} : vector<8x16xf32>, vector<8x16xf32>, vector<8x8xf32> -> vector<8x8xf32>
    %cst_76 = arith.constant 2.500000e-01 : f32
    %164 = vector.broadcast %cst_76 : f32 to vector<8x8xf32>
    %165 = arith.mulf %163, %164 : vector<8x8xf32>
    %166 = vector.broadcast %1 : vector<1x8xf32> to vector<8x8xf32>
    %167 = arith.addf %165, %166 : vector<8x8xf32>
    %cst_77 = arith.constant dense<0xFF800000> : vector<8xf32>
    %168 = vector.multi_reduction <maximumf>, %167, %cst_77 [1] : vector<8x8xf32> to vector<8xf32>
    %169 = vector.shape_cast %168 : vector<8xf32> to vector<8x1xf32>
    %170 = vector.broadcast %169 : vector<8x1xf32> to vector<8x8xf32>
    %171 = arith.subf %167, %170 : vector<8x8xf32>
    %172 = math.exp %171 : vector<8x8xf32>
    %cst_78 = arith.constant dense<0.000000e+00> : vector<8xf32>
    %173 = vector.multi_reduction <add>, %172, %cst_78 [1] : vector<8x8xf32> to vector<8xf32>
    %174 = vector.shape_cast %173 : vector<8xf32> to vector<8x1xf32>
    %175 = vector.broadcast %174 : vector<8x1xf32> to vector<8x8xf32>
    %176 = arith.divf %172, %175 : vector<8x8xf32>
    %cst_79 = arith.constant dense<0.000000e+00> : vector<8x16xf32>
    %177 = tpu.matmul %176, %162, %cst_79 {dimension_numbers = #tpu.dot_dimension_numbers<[1], [0], [0], [1], [0, 0, 1, 1], [], []>} : vector<8x8xf32>, vector<8x16xf32>, vector<8x16xf32> -> vector<8x16xf32>
    %178 = vector.extract_strided_slice %158 {offsets = [0, 0], sizes = [16, 32], strides = [1, 1]} : vector<32x32xf32> to vector<16x32xf32>
    %cst_80 = arith.constant dense<0.000000e+00> : vector<8x32xf32>
    %179 = tpu.matmul %177, %178, %cst_80 {dimension_numbers = #tpu.dot_dimension_numbers<[1], [0], [0], [1], [0, 0, 1, 1], [], []>} : vector<8x16xf32>, vector<16x32xf32>, vector<8x32xf32> -> vector<8x32xf32>
    %180 = arith.addf %159, %179 : vector<8x32xf32>
    %181 = vector.extract_strided_slice %157 {offsets = [0, 16], sizes = [8, 16], strides = [1, 1]} : vector<8x96xf32> to vector<8x16xf32>
    %182 = vector.extract_strided_slice %157 {offsets = [0, 48], sizes = [8, 16], strides = [1, 1]} : vector<8x96xf32> to vector<8x16xf32>
    %183 = vector.extract_strided_slice %157 {offsets = [0, 80], sizes = [8, 16], strides = [1, 1]} : vector<8x96xf32> to vector<8x16xf32>
    %cst_81 = arith.constant dense<0.000000e+00> : vector<8x8xf32>
    %184 = tpu.matmul %181, %182, %cst_81 {dimension_numbers = #tpu.dot_dimension_numbers<[1], [1], [0], [0], [0, 0, 1, 0], [], []>} : vector<8x16xf32>, vector<8x16xf32>, vector<8x8xf32> -> vector<8x8xf32>
    %cst_82 = arith.constant 2.500000e-01 : f32
    %185 = vector.broadcast %cst_82 : f32 to vector<8x8xf32>
    %186 = arith.mulf %184, %185 : vector<8x8xf32>
    %187 = vector.broadcast %1 : vector<1x8xf32> to vector<8x8xf32>
    %188 = arith.addf %186, %187 : vector<8x8xf32>
    %cst_83 = arith.constant dense<0xFF800000> : vector<8xf32>
    %189 = vector.multi_reduction <maximumf>, %188, %cst_83 [1] : vector<8x8xf32> to vector<8xf32>
    %190 = vector.shape_cast %189 : vector<8xf32> to vector<8x1xf32>
    %191 = vector.broadcast %190 : vector<8x1xf32> to vector<8x8xf32>
    %192 = arith.subf %188, %191 : vector<8x8xf32>
    %193 = math.exp %192 : vector<8x8xf32>
    %cst_84 = arith.constant dense<0.000000e+00> : vector<8xf32>
    %194 = vector.multi_reduction <add>, %193, %cst_84 [1] : vector<8x8xf32> to vector<8xf32>
    %195 = vector.shape_cast %194 : vector<8xf32> to vector<8x1xf32>
    %196 = vector.broadcast %195 : vector<8x1xf32> to vector<8x8xf32>
    %197 = arith.divf %193, %196 : vector<8x8xf32>
    %cst_85 = arith.constant dense<0.000000e+00> : vector<8x16xf32>
    %198 = tpu.matmul %197, %183, %cst_85 {dimension_numbers = #tpu.dot_dimension_numbers<[1], [0], [0], [1], [0, 0, 1, 1], [], []>} : vector<8x8xf32>, vector<8x16xf32>, vector<8x16xf32> -> vector<8x16xf32>
    %199 = vector.extract_strided_slice %158 {offsets = [16, 0], sizes = [16, 32], strides = [1, 1]} : vector<32x32xf32> to vector<16x32xf32>
    %cst_86 = arith.constant dense<0.000000e+00> : vector<8x32xf32>
    %200 = tpu.matmul %198, %199, %cst_86 {dimension_numbers = #tpu.dot_dimension_numbers<[1], [0], [0], [1], [0, 0, 1, 1], [], []>} : vector<8x16xf32>, vector<16x32xf32>, vector<8x32xf32> -> vector<8x32xf32>
    %201 = arith.addf %180, %200 : vector<8x32xf32>
    %c0_87 = arith.constant 0 : index
    %c0_88 = arith.constant 0 : index
    %202 = vector.load %arg20[%c0_87, %c0_88] : memref<1x32xf32, #tpu.memory_space<vmem>>, vector<1x32xf32>
    %203 = vector.broadcast %202 : vector<1x32xf32> to vector<8x32xf32>
    %204 = arith.addf %201, %203 : vector<8x32xf32>
    %205 = arith.addf %152, %204 : vector<8x32xf32>
    %c0_89 = arith.constant 0 : index
    %c0_90 = arith.constant 0 : index
    %206 = vector.load %arg21[%c0_89, %c0_90] : memref<1x32xf32, #tpu.memory_space<vmem>>, vector<1x32xf32>
    %c0_91 = arith.constant 0 : index
    %c0_92 = arith.constant 0 : index
    %207 = vector.load %arg22[%c0_91, %c0_92] : memref<1x32xf32, #tpu.memory_space<vmem>>, vector<1x32xf32>
    %cst_93 = arith.constant dense<0.000000e+00> : vector<8xf32>
    %208 = vector.multi_reduction <add>, %205, %cst_93 [1] : vector<8x32xf32> to vector<8xf32>
    %209 = vector.shape_cast %208 : vector<8xf32> to vector<8x1xf32>
    %cst_94 = arith.constant 3.200000e+01 : f32
    %210 = vector.broadcast %cst_94 : f32 to vector<8x1xf32>
    %211 = arith.divf %209, %210 : vector<8x1xf32>
    %212 = vector.broadcast %211 : vector<8x1xf32> to vector<8x32xf32>
    %213 = arith.subf %205, %212 : vector<8x32xf32>
    %214 = arith.mulf %213, %213 : vector<8x32xf32>
    %cst_95 = arith.constant dense<0.000000e+00> : vector<8xf32>
    %215 = vector.multi_reduction <add>, %214, %cst_95 [1] : vector<8x32xf32> to vector<8xf32>
    %216 = vector.shape_cast %215 : vector<8xf32> to vector<8x1xf32>
    %cst_96 = arith.constant 3.200000e+01 : f32
    %217 = vector.broadcast %cst_96 : f32 to vector<8x1xf32>
    %218 = arith.divf %216, %217 : vector<8x1xf32>
    %219 = vector.broadcast %211 : vector<8x1xf32> to vector<8x32xf32>
    %220 = arith.subf %205, %219 : vector<8x32xf32>
    %cst_97 = arith.constant 9.99999996E-13 : f32
    %221 = vector.broadcast %cst_97 : f32 to vector<8x1xf32>
    %222 = arith.addf %218, %221 : vector<8x1xf32>
    %223 = math.rsqrt %222 : vector<8x1xf32>
    %224 = vector.broadcast %223 : vector<8x1xf32> to vector<8x32xf32>
    %225 = arith.mulf %220, %224 : vector<8x32xf32>
    %226 = vector.broadcast %206 : vector<1x32xf32> to vector<8x32xf32>
    %227 = arith.mulf %225, %226 : vector<8x32xf32>
    %228 = vector.broadcast %207 : vector<1x32xf32> to vector<8x32xf32>
    %229 = arith.addf %227, %228 : vector<8x32xf32>
    %c0_98 = arith.constant 0 : index
    %c0_99 = arith.constant 0 : index
    %230 = vector.load %arg23[%c0_98, %c0_99] : memref<32x64xf32, #tpu.memory_space<vmem>>, vector<32x64xf32>
    %cst_100 = arith.constant dense<0.000000e+00> : vector<8x64xf32>
    %231 = tpu.matmul %229, %230, %cst_100 {dimension_numbers = #tpu.dot_dimension_numbers<[1], [0], [0], [1], [0, 0, 1, 1], [], []>} : vector<8x32xf32>, vector<32x64xf32>, vector<8x64xf32> -> vector<8x64xf32>
    %c0_101 = arith.constant 0 : index
    %c0_102 = arith.constant 0 : index
    %232 = vector.load %arg24[%c0_101, %c0_102] : memref<1x64xf32, #tpu.memory_space<vmem>>, vector<1x64xf32>
    %233 = vector.broadcast %232 : vector<1x64xf32> to vector<8x64xf32>
    %234 = arith.addf %231, %233 : vector<8x64xf32>
    %cst_103 = arith.constant 5.000000e-01 : f32
    %235 = vector.broadcast %cst_103 : f32 to vector<8x64xf32>
    %236 = arith.mulf %235, %234 : vector<8x64xf32>
    %cst_104 = arith.constant 4.471500e-02 : f32
    %237 = vector.broadcast %cst_104 : f32 to vector<8x64xf32>
    %238 = arith.mulf %237, %234 : vector<8x64xf32>
    %239 = arith.mulf %238, %234 : vector<8x64xf32>
    %240 = arith.mulf %239, %234 : vector<8x64xf32>
    %241 = arith.addf %234, %240 : vector<8x64xf32>
    %cst_105 = arith.constant 0.797884583 : f32
    %242 = vector.broadcast %cst_105 : f32 to vector<8x64xf32>
    %243 = arith.mulf %242, %241 : vector<8x64xf32>
    %244 = math.tanh %243 : vector<8x64xf32>
    %cst_106 = arith.constant 1.000000e+00 : f32
    %245 = vector.broadcast %cst_106 : f32 to vector<8x64xf32>
    %246 = arith.addf %245, %244 : vector<8x64xf32>
    %247 = arith.mulf %236, %246 : vector<8x64xf32>
    %c0_107 = arith.constant 0 : index
    %c0_108 = arith.constant 0 : index
    %248 = vector.load %arg25[%c0_107, %c0_108] : memref<64x32xf32, #tpu.memory_space<vmem>>, vector<64x32xf32>
    %cst_109 = arith.constant dense<0.000000e+00> : vector<8x32xf32>
    %249 = tpu.matmul %247, %248, %cst_109 {dimension_numbers = #tpu.dot_dimension_numbers<[1], [0], [0], [1], [0, 0, 1, 1], [], []>} : vector<8x64xf32>, vector<64x32xf32>, vector<8x32xf32> -> vector<8x32xf32>
    %c0_110 = arith.constant 0 : index
    %c0_111 = arith.constant 0 : index
    %250 = vector.load %arg26[%c0_110, %c0_111] : memref<1x32xf32, #tpu.memory_space<vmem>>, vector<1x32xf32>
    %251 = vector.broadcast %250 : vector<1x32xf32> to vector<8x32xf32>
    %252 = arith.addf %249, %251 : vector<8x32xf32>
    %253 = arith.addf %229, %252 : vector<8x32xf32>
    %c0_112 = arith.constant 0 : index
    %c0_113 = arith.constant 0 : index
    %254 = vector.load %arg27[%c0_112, %c0_113] : memref<1x32xf32, #tpu.memory_space<vmem>>, vector<1x32xf32>
    %c0_114 = arith.constant 0 : index
    %c0_115 = arith.constant 0 : index
    %255 = vector.load %arg28[%c0_114, %c0_115] : memref<1x32xf32, #tpu.memory_space<vmem>>, vector<1x32xf32>
    %cst_116 = arith.constant dense<0.000000e+00> : vector<8xf32>
    %256 = vector.multi_reduction <add>, %253, %cst_116 [1] : vector<8x32xf32> to vector<8xf32>
    %257 = vector.shape_cast %256 : vector<8xf32> to vector<8x1xf32>
    %cst_117 = arith.constant 3.200000e+01 : f32
    %258 = vector.broadcast %cst_117 : f32 to vector<8x1xf32>
    %259 = arith.divf %257, %258 : vector<8x1xf32>
    %260 = vector.broadcast %259 : vector<8x1xf32> to vector<8x32xf32>
    %261 = arith.subf %253, %260 : vector<8x32xf32>
    %262 = arith.mulf %261, %261 : vector<8x32xf32>
    %cst_118 = arith.constant dense<0.000000e+00> : vector<8xf32>
    %263 = vector.multi_reduction <add>, %262, %cst_118 [1] : vector<8x32xf32> to vector<8xf32>
    %264 = vector.shape_cast %263 : vector<8xf32> to vector<8x1xf32>
    %cst_119 = arith.constant 3.200000e+01 : f32
    %265 = vector.broadcast %cst_119 : f32 to vector<8x1xf32>
    %266 = arith.divf %264, %265 : vector<8x1xf32>
    %267 = vector.broadcast %259 : vector<8x1xf32> to vector<8x32xf32>
    %268 = arith.subf %253, %267 : vector<8x32xf32>
    %cst_120 = arith.constant 9.99999996E-13 : f32
    %269 = vector.broadcast %cst_120 : f32 to vector<8x1xf32>
    %270 = arith.addf %266, %269 : vector<8x1xf32>
    %271 = math.rsqrt %270 : vector<8x1xf32>
    %272 = vector.broadcast %271 : vector<8x1xf32> to vector<8x32xf32>
    %273 = arith.mulf %268, %272 : vector<8x32xf32>
    %274 = vector.broadcast %254 : vector<1x32xf32> to vector<8x32xf32>
    %275 = arith.mulf %273, %274 : vector<8x32xf32>
    %276 = vector.broadcast %255 : vector<1x32xf32> to vector<8x32xf32>
    %277 = arith.addf %275, %276 : vector<8x32xf32>
    %278 = vector.extract_strided_slice %277 {offsets = [0, 0], sizes = [1, 32], strides = [1, 1]} : vector<8x32xf32> to vector<1x32xf32>
    %c0_121 = arith.constant 0 : index
    %c0_122 = arith.constant 0 : index
    %279 = vector.load %arg29[%c0_121, %c0_122] : memref<32x32xf32, #tpu.memory_space<vmem>>, vector<32x32xf32>
    %cst_123 = arith.constant dense<0.000000e+00> : vector<1x32xf32>
    %280 = tpu.matmul %278, %279, %cst_123 {dimension_numbers = #tpu.dot_dimension_numbers<[1], [0], [0], [1], [0, 0, 1, 1], [], []>} : vector<1x32xf32>, vector<32x32xf32>, vector<1x32xf32> -> vector<1x32xf32>
    %c0_124 = arith.constant 0 : index
    %c0_125 = arith.constant 0 : index
    %281 = vector.load %arg30[%c0_124, %c0_125] : memref<1x32xf32, #tpu.memory_space<vmem>>, vector<1x32xf32>
    %282 = arith.addf %280, %281 : vector<1x32xf32>
    %283 = math.tanh %282 : vector<1x32xf32>
    %c0_126 = arith.constant 0 : index
    %c0_127 = arith.constant 0 : index
    %284 = vector.load %arg31[%c0_126, %c0_127] : memref<32x128xf32, #tpu.memory_space<vmem>>, vector<32x128xf32>
    %cst_128 = arith.constant dense<0.000000e+00> : vector<1x128xf32>
    %285 = tpu.matmul %283, %284, %cst_128 {dimension_numbers = #tpu.dot_dimension_numbers<[1], [0], [0], [1], [0, 0, 1, 1], [], []>} : vector<1x32xf32>, vector<32x128xf32>, vector<1x128xf32> -> vector<1x128xf32>
    %c0_129 = arith.constant 0 : index
    %c0_130 = arith.constant 0 : index
    %286 = vector.load %arg32[%c0_129, %c0_130] : memref<1x128xf32, #tpu.memory_space<vmem>>, vector<1x128xf32>
    %287 = arith.addf %285, %286 : vector<1x128xf32>
    %cst_131 = arith.constant 0.000000e+00 : f32
    %288 = vector.broadcast %cst_131 : f32 to vector<1x128xf32>
    %289 = arith.cmpf oge, %287, %288 : vector<1x128xf32>
    %cst_132 = arith.constant 0.000000e+00 : f32
    %290 = vector.broadcast %cst_132 : f32 to vector<1x128xf32>
    %291 = arith.subf %290, %287 : vector<1x128xf32>
    %292 = math.exp %291 : vector<1x128xf32>
    %cst_133 = arith.constant 1.000000e+00 : f32
    %293 = vector.broadcast %cst_133 : f32 to vector<1x128xf32>
    %294 = arith.addf %293, %292 : vector<1x128xf32>
    %cst_134 = arith.constant 1.000000e+00 : f32
    %295 = vector.broadcast %cst_134 : f32 to vector<1x128xf32>
    %296 = arith.divf %295, %294 : vector<1x128xf32>
    %297 = math.exp %287 : vector<1x128xf32>
    %298 = math.exp %287 : vector<1x128xf32>
    %cst_135 = arith.constant 1.000000e+00 : f32
    %299 = vector.broadcast %cst_135 : f32 to vector<1x128xf32>
    %300 = arith.addf %299, %298 : vector<1x128xf32>
    %301 = arith.divf %297, %300 : vector<1x128xf32>
    %302 = arith.select %289, %296, %301 : vector<1x128xi1>, vector<1x128xf32>
    %c0_136 = arith.constant 0 : index
    %c0_137 = arith.constant 0 : index
    %c0_138 = arith.constant 0 : index
    %303 = vector.load %arg33[%c0_136, %c0_137, %c0_138] : memref<1x1x128xf32, #tpu.memory_space<vmem>>, vector<1x1x128xf32>
    %304 = vector.shape_cast %303 : vector<1x1x128xf32> to vector<1x128xf32>
    %305 = vector.shape_cast %302 : vector<1x128xf32> to vector<1x1x128xf32>
    tpu.vector_store %arg33[%c0_136, %c0_137, %c0_138], %305 {strides = array<i32>} : memref<1x1x128xf32, #tpu.memory_space<vmem>>, vector<1x1x128xf32>,
    return
  }
  func.func @transform_0(%arg0: i32) -> (i32, i32, i32) {
    %c0_i32 = arith.constant 0 : i32
    %c0_i32_0 = arith.constant 0 : i32
    %c0_i32_1 = arith.constant 0 : i32
    return %arg0, %c0_i32, %c0_i32_0 : i32, i32, i32
  }
  func.func @transform_1(%arg0: i32) -> (i32, i32, i32) {
    %c0_i32 = arith.constant 0 : i32
    %c0_i32_0 = arith.constant 0 : i32
    %c0_i32_1 = arith.constant 0 : i32
    return %arg0, %c0_i32, %c0_i32_0 : i32, i32, i32
  }
  func.func @transform_2(%arg0: i32) -> (i32, i32) {
    %c0_i32 = arith.constant 0 : i32
    %c0_i32_0 = arith.constant 0 : i32
    %c0_i32_1 = arith.constant 0 : i32
    return %c0_i32, %c0_i32_0 : i32, i32
  }
  func.func @transform_3(%arg0: i32) -> (i32, i32) {
    %c0_i32 = arith.constant 0 : i32
    %c0_i32_0 = arith.constant 0 : i32
    %c0_i32_1 = arith.constant 0 : i32
    return %c0_i32, %c0_i32_0 : i32, i32
  }
  func.func @transform_4(%arg0: i32) -> (i32, i32) {
    %c0_i32 = arith.constant 0 : i32
    %c0_i32_0 = arith.constant 0 : i32
    %c0_i32_1 = arith.constant 0 : i32
    return %c0_i32, %c0_i32_0 : i32, i32
  }
  func.func @transform_5(%arg0: i32) -> (i32, i32) {
    %c0_i32 = arith.constant 0 : i32
    %c0_i32_0 = arith.constant 0 : i32
    %c0_i32_1 = arith.constant 0 : i32
    return %c0_i32, %c0_i32_0 : i32, i32
  }
  func.func @transform_6(%arg0: i32) -> (i32, i32) {
    %c0_i32 = arith.constant 0 : i32
    %c0_i32_0 = arith.constant 0 : i32
    %c0_i32_1 = arith.constant 0 : i32
    return %c0_i32, %c0_i32_0 : i32, i32
  }
  func.func @transform_7(%arg0: i32) -> (i32, i32) {
    %c0_i32 = arith.constant 0 : i32
    %c0_i32_0 = arith.constant 0 : i32
    %c0_i32_1 = arith.constant 0 : i32
    return %c0_i32, %c0_i32_0 : i32, i32
  }
  func.func @transform_8(%arg0: i32) -> (i32, i32) {
    %c0_i32 = arith.constant 0 : i32
    %c0_i32_0 = arith.constant 0 : i32
    %c0_i32_1 = arith.constant 0 : i32
    return %c0_i32, %c0_i32_0 : i32, i32
  }
  func.func @transform_9(%arg0: i32) -> (i32, i32) {
    %c0_i32 = arith.constant 0 : i32
    %c0_i32_0 = arith.constant 0 : i32
    %c0_i32_1 = arith.constant 0 : i32
    return %c0_i32, %c0_i32_0 : i32, i32
  }
  func.func @transform_10(%arg0: i32) -> (i32, i32) {
    %c0_i32 = arith.constant 0 : i32
    %c0_i32_0 = arith.constant 0 : i32
    %c0_i32_1 = arith.constant 0 : i32
    return %c0_i32, %c0_i32_0 : i32, i32
  }
  func.func @transform_11(%arg0: i32) -> (i32, i32) {
    %c0_i32 = arith.constant 0 : i32
    %c0_i32_0 = arith.constant 0 : i32
    %c0_i32_1 = arith.constant 0 : i32
    return %c0_i32, %c0_i32_0 : i32, i32
  }
  func.func @transform_12(%arg0: i32) -> (i32, i32) {
    %c0_i32 = arith.constant 0 : i32
    %c0_i32_0 = arith.constant 0 : i32
    %c0_i32_1 = arith.constant 0 : i32
    return %c0_i32, %c0_i32_0 : i32, i32
  }
  func.func @transform_13(%arg0: i32) -> (i32, i32) {
    %c0_i32 = arith.constant 0 : i32
    %c0_i32_0 = arith.constant 0 : i32
    %c0_i32_1 = arith.constant 0 : i32
    return %c0_i32, %c0_i32_0 : i32, i32
  }
  func.func @transform_14(%arg0: i32) -> (i32, i32) {
    %c0_i32 = arith.constant 0 : i32
    %c0_i32_0 = arith.constant 0 : i32
    %c0_i32_1 = arith.constant 0 : i32
    return %c0_i32, %c0_i32_0 : i32, i32
  }
  func.func @transform_15(%arg0: i32) -> (i32, i32) {
    %c0_i32 = arith.constant 0 : i32
    %c0_i32_0 = arith.constant 0 : i32
    %c0_i32_1 = arith.constant 0 : i32
    return %c0_i32, %c0_i32_0 : i32, i32
  }
  func.func @transform_16(%arg0: i32) -> (i32, i32) {
    %c0_i32 = arith.constant 0 : i32
    %c0_i32_0 = arith.constant 0 : i32
    %c0_i32_1 = arith.constant 0 : i32
    return %c0_i32, %c0_i32_0 : i32, i32
  }
  func.func @transform_17(%arg0: i32) -> (i32, i32) {
    %c0_i32 = arith.constant 0 : i32
    %c0_i32_0 = arith.constant 0 : i32
    %c0_i32_1 = arith.constant 0 : i32
    return %c0_i32, %c0_i32_0 : i32, i32
  }
  func.func @transform_18(%arg0: i32) -> (i32, i32) {
    %c0_i32 = arith.constant 0 : i32
    %c0_i32_0 = arith.constant 0 : i32
    %c0_i32_1 = arith.constant 0 : i32
    return %c0_i32, %c0_i32_0 : i32, i32
  }
  func.func @transform_19(%arg0: i32) -> (i32, i32) {
    %c0_i32 = arith.constant 0 : i32
    %c0_i32_0 = arith.constant 0 : i32
    %c0_i32_1 = arith.constant 0 : i32
    return %c0_i32, %c0_i32_0 : i32, i32
  }
  func.func @transform_20(%arg0: i32) -> (i32, i32) {
    %c0_i32 = arith.constant 0 : i32
    %c0_i32_0 = arith.constant 0 : i32
    %c0_i32_1 = arith.constant 0 : i32
    return %c0_i32, %c0_i32_0 : i32, i32
  }
  func.func @transform_21(%arg0: i32) -> (i32, i32) {
    %c0_i32 = arith.constant 0 : i32
    %c0_i32_0 = arith.constant 0 : i32
    %c0_i32_1 = arith.constant 0 : i32
    return %c0_i32, %c0_i32_0 : i32, i32
  }
  func.func @transform_22(%arg0: i32) -> (i32, i32) {
    %c0_i32 = arith.constant 0 : i32
    %c0_i32_0 = arith.constant 0 : i32
    %c0_i32_1 = arith.constant 0 : i32
    return %c0_i32, %c0_i32_0 : i32, i32
  }
  func.func @transform_23(%arg0: i32) -> (i32, i32) {
    %c0_i32 = arith.constant 0 : i32
    %c0_i32_0 = arith.constant 0 : i32
    %c0_i32_1 = arith.constant 0 : i32
    return %c0_i32, %c0_i32_0 : i32, i32
  }
  func.func @transform_24(%arg0: i32) -> (i32, i32) {
    %c0_i32 = arith.constant 0 : i32
    %c0_i32_0 = arith.constant 0 : i32
    %c0_i32_1 = arith.constant 0 : i32
    return %c0_i32, %c0_i32_0 : i32, i32
  }
  func.func @transform_25(%arg0: i32) -> (i32, i32) {
    %c0_i32 = arith.constant 0 : i32
    %c0_i32_0 = arith.constant 0 : i32
    %c0_i32_1 = arith.constant 0 : i32
    return %c0_i32, %c0_i32_0 : i32, i32
  }
  func.func @transform_26(%arg0: i32) -> (i32, i32) {
    %c0_i32 = arith.constant 0 : i32
    %c0_i32_0 = arith.constant 0 : i32
    %c0_i32_1 = arith.constant 0 : i32
    return %c0_i32, %c0_i32_0 : i32, i32
  }
  func.func @transform_27(%arg0: i32) -> (i32, i32) {
    %c0_i32 = arith.constant 0 : i32
    %c0_i32_0 = arith.constant 0 : i32
    %c0_i32_1 = arith.constant 0 : i32
    return %c0_i32, %c0_i32_0 : i32, i32
  }
  func.func @transform_28(%arg0: i32) -> (i32, i32) {
    %c0_i32 = arith.constant 0 : i32
    %c0_i32_0 = arith.constant 0 : i32
    %c0_i32_1 = arith.constant 0 : i32
    return %c0_i32, %c0_i32_0 : i32, i32
  }
  func.func @transform_29(%arg0: i32) -> (i32, i32) {
    %c0_i32 = arith.constant 0 : i32
    %c0_i32_0 = arith.constant 0 : i32
    %c0_i32_1 = arith.constant 0 : i32
    return %c0_i32, %c0_i32_0 : i32, i32
  }
  func.func @transform_30(%arg0: i32) -> (i32, i32) {
    %c0_i32 = arith.constant 0 : i32
    %c0_i32_0 = arith.constant 0 : i32
    %c0_i32_1 = arith.constant 0 : i32
    return %c0_i32, %c0_i32_0 : i32, i32
  }
  func.func @transform_31(%arg0: i32) -> (i32, i32) {
    %c0_i32 = arith.constant 0 : i32
    %c0_i32_0 = arith.constant 0 : i32
    %c0_i32_1 = arith.constant 0 : i32
    return %c0_i32, %c0_i32_0 : i32, i32
  }
  func.func @transform_32(%arg0: i32) -> (i32, i32, i32) {
    %c0_i32 = arith.constant 0 : i32
    %c0_i32_0 = arith.constant 0 : i32
    %c0_i32_1 = arith.constant 0 : i32
    return %arg0, %c0_i32, %c0_i32_0 : i32, i32, i32
  }
}

</mosaic_0001>

<llo_original>
// kernel: tpu_custom_call.1
$region0: #{tpu_custom_call.1}
  #allocation0 [shape = 'u32[]', space=smem, size = 0x4, offset = 0x4, fixed_abs, tag = 'smem constant byte address 0x4 - core index']
  #allocation1 [shape = 'u32[72,128]{1,0:T(1,128)}', space=vmem, size = 0x9000, scoped, tag = 'internal scratch']
  %s0 = inlined_call_operand.smem [shape: u32[33], index: -1, kind: input, shape index: {}]
  %s1 = sld [smem:[%s0]]
  %s2 = scalar_lea.smem %s0, 1
  %s3 = sld [smem:[%s2]]
  %s4 = scalar_lea.smem %s0, 2
  %s5 = sld [smem:[%s4]]
  %s6 = scalar_lea.smem %s0, 3
  %s7 = sld [smem:[%s6]]
  %s8 = scalar_lea.smem %s0, 4
  %s9 = sld [smem:[%s8]]
  %s10 = scalar_lea.smem %s0, 5
  %s11 = sld [smem:[%s10]]
  %s12 = scalar_lea.smem %s0, 6
  %s13 = sld [smem:[%s12]]
  %s14 = scalar_lea.smem %s0, 7
  %s15 = sld [smem:[%s14]]
  %s16 = scalar_lea.smem %s0, 8
  %s17 = sld [smem:[%s16]]
  %s18 = scalar_lea.smem %s0, 9
  %s19 = sld [smem:[%s18]]
  %s20 = scalar_lea.smem %s0, 10
  %s21 = sld [smem:[%s20]]
  %s22 = scalar_lea.smem %s0, 11
  %s23 = sld [smem:[%s22]]
  %s24 = scalar_lea.smem %s0, 12
  %s25 = sld [smem:[%s24]]
  %s26 = scalar_lea.smem %s0, 13
  %s27 = sld [smem:[%s26]]
  %s28 = scalar_lea.smem %s0, 14
  %s29 = sld [smem:[%s28]]
  %s30 = scalar_lea.smem %s0, 15
  %s31 = sld [smem:[%s30]]
  %s32 = scalar_lea.smem %s0, 16
  %s33 = sld [smem:[%s32]]
  %s34 = scalar_lea.smem %s0, 17
  %s35 = sld [smem:[%s34]]
  %s36 = scalar_lea.smem %s0, 18
  %s37 = sld [smem:[%s36]]
  %s38 = scalar_lea.smem %s0, 19
  %s39 = sld [smem:[%s38]]
  %s40 = scalar_lea.smem %s0, 20
  %s41 = sld [smem:[%s40]]
  %s42 = scalar_lea.smem %s0, 21
  %s43 = sld [smem:[%s42]]
  %s44 = scalar_lea.smem %s0, 22
  %s45 = sld [smem:[%s44]]
  %s46 = scalar_lea.smem %s0, 23
  %s47 = sld [smem:[%s46]]
  %s48 = scalar_lea.smem %s0, 24
  %s49 = sld [smem:[%s48]]
  %s50 = scalar_lea.smem %s0, 25
  %s51 = sld [smem:[%s50]]
  %s52 = scalar_lea.smem %s0, 26
  %s53 = sld [smem:[%s52]]
  %s54 = scalar_lea.smem %s0, 27
  %s55 = sld [smem:[%s54]]
  %s56 = scalar_lea.smem %s0, 28
  %s57 = sld [smem:[%s56]]
  %s58 = scalar_lea.smem %s0, 29
  %s59 = sld [smem:[%s58]]
  %s60 = scalar_lea.smem %s0, 30
  %s61 = sld [smem:[%s60]]
  %s62 = scalar_lea.smem %s0, 31
  %s63 = sld [smem:[%s62]]
  %s64 = scalar_lea.smem %s0, 32
  %s65 = sld [smem:[%s64]]
  %s66 = sld [smem:[#allocation0]]
  $region185: #{tpu_custom_call.1} parent=0
    _
  %s68 = ssub.s32 1, %s66
  %s69 = scalar_select 0, %s68, %s66
  $region1: #{tpu_custom_call.1} parent=0
    #allocation2 [shape = 'u8[8192]{0}', space=vmem, size = 0x2000, scoped, tag = 'input window, operand 0']
    #allocation3 [shape = 's32[2]{0}', space=sflag, size = 0x8, scoped, tag = 'scoped memory for tpu_custom_call.1']
    #allocation4 [shape = 's32[2]{0}', space=sflag, size = 0x8, scoped, tag = 'scoped memory for tpu_custom_call.1']
    #allocation5 [shape = 'u8[1024]{0}', space=vmem, size = 0x400, scoped, tag = 'input window, operand 1']
    #allocation6 [shape = 's32[2]{0}', space=sflag, size = 0x8, scoped, tag = 'scoped memory for tpu_custom_call.1']
    #allocation7 [shape = 'u8[512]{0}', space=vmem, size = 0x400, scoped, tag = 'input window, operand 2, single buffered']
    #allocation8 [shape = 'u8[16384]{0}', space=vmem, size = 0x4000, scoped, tag = 'input window, operand 22, single buffered']
    #allocation9 [shape = 's32[1]{0}', space=sflag, size = 0x4, scoped, tag = 'scoped memory for tpu_custom_call.1']
    #allocation10 [shape = 'u8[16384]{0}', space=vmem, size = 0x4000, scoped, tag = 'input window, operand 28, single buffered']
    #allocation11 [shape = 'u8[16384]{0}', space=vmem, size = 0x4000, scoped, tag = 'input window, operand 30, single buffered']
    #allocation12 [shape = 's32[1]{0}', space=sflag, size = 0x4, scoped, tag = 'scoped memory for tpu_custom_call.1']
    #allocation13 [shape = 'u8[1024]{0}', space=vmem, size = 0x400, scoped, tag = 'output window, operand 0']
    %70 = vsyncpa [#allocation3], 0
    %s71 = scalar_lea.sflag [#allocation3], 1
    %72 = vsyncpa %s71, 0
    %73 = vsyncpa [#allocation6], 0
    %s74 = scalar_lea.sflag [#allocation6], 1
    %75 = vsyncpa %s74, 0
    %76 = vsyncpa [#allocation9], 0
    %77 = vsyncpa [#allocation12], 0
    %78 = vsyncpa [#allocation4], 0
    %s79 = scalar_lea.sflag [#allocation4], 1
    %80 = vsyncpa %s79, 0
    loop: start=0, step=1, limit=4
    $region2: #{tpu_custom_call.1} parent=1 // loop_pre_header
      _
    $region3: #{tpu_custom_call.1} parent=1 // loop_header
      %s82 = sphi 0, %s86
      %p83 = scmp.ge.s32.totalorder %s82, 4
      %s92 = sphi 0, %s94
      %s95 = sphi 0, %s92
      %s96 = sphi 0, %s95
      %s112 = sphi 0, %s96
      %s118 = sphi 0, %s120
      %s121 = sphi 0, %s118
      %s122 = sphi 0, %s121
      %s138 = sphi 0, %s122
      %s142 = sphi 0, %s142
      %s144 = sphi 0, %s142
      %s145 = sphi 0, %s144
      %s159 = sphi 0, %s145
      %s163 = sphi 0, %s163
      %s165 = sphi 0, %s163
      %s166 = sphi 0, %s165
      %s180 = sphi 0, %s166
      %s184 = sphi 0, %s184
      %s186 = sphi 0, %s184
      %s187 = sphi 0, %s186
      %s201 = sphi 0, %s187
      %s205 = sphi 0, %s205
      %s207 = sphi 0, %s205
      %s208 = sphi 0, %s207
      %s222 = sphi 0, %s208
      %s226 = sphi 0, %s226
      %s228 = sphi 0, %s226
      %s229 = sphi 0, %s228
      %s243 = sphi 0, %s229
      %s247 = sphi 0, %s247
      %s249 = sphi 0, %s247
      %s250 = sphi 0, %s249
      %s264 = sphi 0, %s250
      %s268 = sphi 0, %s268
      %s270 = sphi 0, %s268
      %s271 = sphi 0, %s270
      %s285 = sphi 0, %s271
      %s289 = sphi 0, %s289
      %s291 = sphi 0, %s289
      %s292 = sphi 0, %s291
      %s306 = sphi 0, %s292
      %s310 = sphi 0, %s310
      %s312 = sphi 0, %s310
      %s313 = sphi 0, %s312
      %s327 = sphi 0, %s313
      %s331 = sphi 0, %s331
      %s333 = sphi 0, %s331
      %s334 = sphi 0, %s333
      %s348 = sphi 0, %s334
      %s352 = sphi 0, %s352
      %s354 = sphi 0, %s352
      %s355 = sphi 0, %s354
      %s369 = sphi 0, %s355
      %s373 = sphi 0, %s373
      %s375 = sphi 0, %s373
      %s376 = sphi 0, %s375
      %s390 = sphi 0, %s376
      %s394 = sphi 0, %s394
      %s396 = sphi 0, %s394
      %s397 = sphi 0, %s396
      %s411 = sphi 0, %s397
      %s415 = sphi 0, %s415
      %s417 = sphi 0, %s415
      %s418 = sphi 0, %s417
      %s432 = sphi 0, %s418
      %s436 = sphi 0, %s436
      %s438 = sphi 0, %s436
      %s439 = sphi 0, %s438
      %s453 = sphi 0, %s439
      %s457 = sphi 0, %s457
      %s459 = sphi 0, %s457
      %s460 = sphi 0, %s459
      %s474 = sphi 0, %s460
      %s478 = sphi 0, %s478
      %s480 = sphi 0, %s478
      %s481 = sphi 0, %s480
      %s495 = sphi 0, %s481
      %s499 = sphi 0, %s499
      %s501 = sphi 0, %s499
      %s502 = sphi 0, %s501
      %s516 = sphi 0, %s502
      %s520 = sphi 0, %s520
      %s522 = sphi 0, %s520
      %s523 = sphi 0, %s522
      %s537 = sphi 0, %s523
      %s541 = sphi 0, %s541
      %s543 = sphi 0, %s541
      %s544 = sphi 0, %s543
      %s558 = sphi 0, %s544
      %s562 = sphi 0, %s562
      %s564 = sphi 0, %s562
      %s565 = sphi 0, %s564
      %s579 = sphi 0, %s565
      %s583 = sphi 0, %s583
      %s585 = sphi 0, %s583
      %s586 = sphi 0, %s585
      %s600 = sphi 0, %s586
      %s604 = sphi 0, %s604
      %s606 = sphi 0, %s604
      %s607 = sphi 0, %s606
      %s621 = sphi 0, %s607
      %s625 = sphi 0, %s625
      %s627 = sphi 0, %s625
      %s628 = sphi 0, %s627
      %s642 = sphi 0, %s628
      %s646 = sphi 0, %s646
      %s648 = sphi 0, %s646
      %s649 = sphi 0, %s648
      %s663 = sphi 0, %s649
      %s667 = sphi 0, %s667
      %s669 = sphi 0, %s667
      %s670 = sphi 0, %s669
      %s684 = sphi 0, %s670
      %s688 = sphi 0, %s688
      %s690 = sphi 0, %s688
      %s691 = sphi 0, %s690
      %s705 = sphi 0, %s691
      %s709 = sphi 0, %s709
      %s711 = sphi 0, %s709
      %s712 = sphi 0, %s711
      %s726 = sphi 0, %s712
      %s730 = sphi 0, %s730
      %s732 = sphi 0, %s730
      %s733 = sphi 0, %s732
      %s747 = sphi 0, %s733
      %s751 = sphi 0, %s751
      %s753 = sphi 0, %s751
      %s754 = sphi 0, %s753
      %s768 = sphi 0, %s754
      %s774 = sphi 0, %s776
      %s777 = sphi 0, %s774
      %s778 = sphi 0, %s777
      %s794 = sphi 0, %s778
    $region4: #{tpu_custom_call.1} parent=1 // loop_header_branch
      %85 = sbr.rel (%p83) target = $region8
    $region5: #{tpu_custom_call.1} parent=1 // loop_body
      %s87 = ssub.s32 %s82, 1
      %s88 = ssub.s32 %s82, 2
      %s89 = sadd.s32 %s82, 1
      %s90 = ssub.s32 %s82, %s89
      %p91 = scmp.eq.s32.totalorder %s90, 0
      %s93 = sadd.s32 %s92, 1
      %s94 = scalar_select %p91, %s92, %s93
      %p97 = pneg %p91
      %p98 = scmp.eq.s32.totalorder %s82, 1
      %p99 = por %p97, %p98
      %p100 = scmp.ne.s32.totalorder %s92, %s95
      %p101 = scmp.eq.s32.totalorder %s82, 0
      %p102 = por %p100, %p101
      %p103 = scmp.ne.s32.totalorder %s92, %s95
      %p104 = scmp.eq.s32.totalorder %s87, 1
      %p105 = por %p103, %p104
      %p106 = scmp.ne.s32.totalorder %s95, %s96
      %p107 = scmp.eq.s32.totalorder %s87, 0
      %p108 = por %p106, %p107
      %p109 = scmp.ne.s32.totalorder %s95, %s96
      %p110 = scmp.eq.s32.totalorder %s88, 1
      %p111 = por %p109, %p110
      %p113 = scmp.ne.s32.totalorder %s96, %s112
      %p114 = scmp.eq.s32.totalorder %s88, 0
      %p115 = por %p113, %p114
      %s116 = ssub.s32 %s82, %s89
      %p117 = scmp.eq.s32.totalorder %s116, 0
      %s119 = sadd.s32 %s118, 1
      %s120 = scalar_select %p117, %s118, %s119
      %p123 = pneg %p117
      %p124 = scmp.eq.s32.totalorder %s82, 1
      %p125 = por %p123, %p124
      %p126 = scmp.ne.s32.totalorder %s118, %s121
      %p127 = scmp.eq.s32.totalorder %s82, 0
      %p128 = por %p126, %p127
      %p129 = scmp.ne.s32.totalorder %s118, %s121
      %p130 = scmp.eq.s32.totalorder %s87, 1
      %p131 = por %p129, %p130
      %p132 = scmp.ne.s32.totalorder %s121, %s122
      %p133 = scmp.eq.s32.totalorder %s87, 0
      %p134 = por %p132, %p133
      %p135 = scmp.ne.s32.totalorder %s121, %s122
      %p136 = scmp.eq.s32.totalorder %s88, 1
      %p137 = por %p135, %p136
      %p139 = scmp.ne.s32.totalorder %s122, %s138
      %p140 = scmp.eq.s32.totalorder %s88, 0
      %p141 = por %p139, %p140
      %s143 = sadd.s32 %s142, 1
      %p146 = scmp.eq.s32.totalorder %s82, 1
      %p147 = scmp.ne.s32.totalorder %s142, %s144
      %p148 = scmp.eq.s32.totalorder %s82, 0
      %p149 = por %p147, %p148
      %p150 = scmp.ne.s32.totalorder %s142, %s144
      %p151 = scmp.eq.s32.totalorder %s87, 1
      %p152 = por %p150, %p151
      %p153 = scmp.ne.s32.totalorder %s144, %s145
      %p154 = scmp.eq.s32.totalorder %s87, 0
      %p155 = por %p153, %p154
      %p156 = scmp.ne.s32.totalorder %s144, %s145
      %p157 = scmp.eq.s32.totalorder %s88, 1
      %p158 = por %p156, %p157
      %p160 = scmp.ne.s32.totalorder %s145, %s159
      %p161 = scmp.eq.s32.totalorder %s88, 0
      %p162 = por %p160, %p161
      %s164 = sadd.s32 %s163, 1
      %p167 = scmp.eq.s32.totalorder %s82, 1
      %p168 = scmp.ne.s32.totalorder %s163, %s165
      %p169 = scmp.eq.s32.totalorder %s82, 0
      %p170 = por %p168, %p169
      %p171 = scmp.ne.s32.totalorder %s163, %s165
      %p172 = scmp.eq.s32.totalorder %s87, 1
      %p173 = por %p171, %p172
      %p174 = scmp.ne.s32.totalorder %s165, %s166
      %p175 = scmp.eq.s32.totalorder %s87, 0
      %p176 = por %p174, %p175
      %p177 = scmp.ne.s32.totalorder %s165, %s166
      %p178 = scmp.eq.s32.totalorder %s88, 1
      %p179 = por %p177, %p178
      %p181 = scmp.ne.s32.totalorder %s166, %s180
      %p182 = scmp.eq.s32.totalorder %s88, 0
      %p183 = por %p181, %p182
      %s185 = sadd.s32 %s184, 1
      %p188 = scmp.eq.s32.totalorder %s82, 1
      %p189 = scmp.ne.s32.totalorder %s184, %s186
      %p190 = scmp.eq.s32.totalorder %s82, 0
      %p191 = por %p189, %p190
      %p192 = scmp.ne.s32.totalorder %s184, %s186
      %p193 = scmp.eq.s32.totalorder %s87, 1
      %p194 = por %p192, %p193
      %p195 = scmp.ne.s32.totalorder %s186, %s187
      %p196 = scmp.eq.s32.totalorder %s87, 0
      %p197 = por %p195, %p196
      %p198 = scmp.ne.s32.totalorder %s186, %s187
      %p199 = scmp.eq.s32.totalorder %s88, 1
      %p200 = por %p198, %p199
      %p202 = scmp.ne.s32.totalorder %s187, %s201
      %p203 = scmp.eq.s32.totalorder %s88, 0
      %p204 = por %p202, %p203
      %s206 = sadd.s32 %s205, 1
      %p209 = scmp.eq.s32.totalorder %s82, 1
      %p210 = scmp.ne.s32.totalorder %s205, %s207
      %p211 = scmp.eq.s32.totalorder %s82, 0
      %p212 = por %p210, %p211
      %p213 = scmp.ne.s32.totalorder %s205, %s207
      %p214 = scmp.eq.s32.totalorder %s87, 1
      %p215 = por %p213, %p214
      %p216 = scmp.ne.s32.totalorder %s207, %s208
      %p217 = scmp.eq.s32.totalorder %s87, 0
      %p218 = por %p216, %p217
      %p219 = scmp.ne.s32.totalorder %s207, %s208
      %p220 = scmp.eq.s32.totalorder %s88, 1
      %p221 = por %p219, %p220
      %p223 = scmp.ne.s32.totalorder %s208, %s222
      %p224 = scmp.eq.s32.totalorder %s88, 0
      %p225 = por %p223, %p224
      %s227 = sadd.s32 %s226, 1
      %p230 = scmp.eq.s32.totalorder %s82, 1
      %p231 = scmp.ne.s32.totalorder %s226, %s228
      %p232 = scmp.eq.s32.totalorder %s82, 0
      %p233 = por %p231, %p232
      %p234 = scmp.ne.s32.totalorder %s226, %s228
      %p235 = scmp.eq.s32.totalorder %s87, 1
      %p236 = por %p234, %p235
      %p237 = scmp.ne.s32.totalorder %s228, %s229
      %p238 = scmp.eq.s32.totalorder %s87, 0
      %p239 = por %p237, %p238
      %p240 = scmp.ne.s32.totalorder %s228, %s229
      %p241 = scmp.eq.s32.totalorder %s88, 1
      %p242 = por %p240, %p241
      %p244 = scmp.ne.s32.totalorder %s229, %s243
      %p245 = scmp.eq.s32.totalorder %s88, 0
      %p246 = por %p244, %p245
      %s248 = sadd.s32 %s247, 1
      %p251 = scmp.eq.s32.totalorder %s82, 1
      %p252 = scmp.ne.s32.totalorder %s247, %s249
      %p253 = scmp.eq.s32.totalorder %s82, 0
      %p254 = por %p252, %p253
      %p255 = scmp.ne.s32.totalorder %s247, %s249
      %p256 = scmp.eq.s32.totalorder %s87, 1
      %p257 = por %p255, %p256
      %p258 = scmp.ne.s32.totalorder %s249, %s250
      %p259 = scmp.eq.s32.totalorder %s87, 0
      %p260 = por %p258, %p259
      %p261 = scmp.ne.s32.totalorder %s249, %s250
      %p262 = scmp.eq.s32.totalorder %s88, 1
      %p263 = por %p261, %p262
      %p265 = scmp.ne.s32.totalorder %s250, %s264
      %p266 = scmp.eq.s32.totalorder %s88, 0
      %p267 = por %p265, %p266
      %s269 = sadd.s32 %s268, 1
      %p272 = scmp.eq.s32.totalorder %s82, 1
      %p273 = scmp.ne.s32.totalorder %s268, %s270
      %p274 = scmp.eq.s32.totalorder %s82, 0
      %p275 = por %p273, %p274
      %p276 = scmp.ne.s32.totalorder %s268, %s270
      %p277 = scmp.eq.s32.totalorder %s87, 1
      %p278 = por %p276, %p277
      %p279 = scmp.ne.s32.totalorder %s270, %s271
      %p280 = scmp.eq.s32.totalorder %s87, 0
      %p281 = por %p279, %p280
      %p282 = scmp.ne.s32.totalorder %s270, %s271
      %p283 = scmp.eq.s32.totalorder %s88, 1
      %p284 = por %p282, %p283
      %p286 = scmp.ne.s32.totalorder %s271, %s285
      %p287 = scmp.eq.s32.totalorder %s88, 0
      %p288 = por %p286, %p287
      %s290 = sadd.s32 %s289, 1
      %p293 = scmp.eq.s32.totalorder %s82, 1
      %p294 = scmp.ne.s32.totalorder %s289, %s291
      %p295 = scmp.eq.s32.totalorder %s82, 0
      %p296 = por %p294, %p295
      %p297 = scmp.ne.s32.totalorder %s289, %s291
      %p298 = scmp.eq.s32.totalorder %s87, 1
      %p299 = por %p297, %p298
      %p300 = scmp.ne.s32.totalorder %s291, %s292
      %p301 = scmp.eq.s32.totalorder %s87, 0
      %p302 = por %p300, %p301
      %p303 = scmp.ne.s32.totalorder %s291, %s292
      %p304 = scmp.eq.s32.totalorder %s88, 1
      %p305 = por %p303, %p304
      %p307 = scmp.ne.s32.totalorder %s292, %s306
      %p308 = scmp.eq.s32.totalorder %s88, 0
      %p309 = por %p307, %p308
      %s311 = sadd.s32 %s310, 1
      %p314 = scmp.eq.s32.totalorder %s82, 1
      %p315 = scmp.ne.s32.totalorder %s310, %s312
      %p316 = scmp.eq.s32.totalorder %s82, 0
      %p317 = por %p315, %p316
      %p318 = scmp.ne.s32.totalorder %s310, %s312
      %p319 = scmp.eq.s32.totalorder %s87, 1
      %p320 = por %p318, %p319
      %p321 = scmp.ne.s32.totalorder %s312, %s313
      %p322 = scmp.eq.s32.totalorder %s87, 0
      %p323 = por %p321, %p322
      %p324 = scmp.ne.s32.totalorder %s312, %s313
      %p325 = scmp.eq.s32.totalorder %s88, 1
      %p326 = por %p324, %p325
      %p328 = scmp.ne.s32.totalorder %s313, %s327
      %p329 = scmp.eq.s32.totalorder %s88, 0
      %p330 = por %p328, %p329
      %s332 = sadd.s32 %s331, 1
      %p335 = scmp.eq.s32.totalorder %s82, 1
      %p336 = scmp.ne.s32.totalorder %s331, %s333
      %p337 = scmp.eq.s32.totalorder %s82, 0
      %p338 = por %p336, %p337
      %p339 = scmp.ne.s32.totalorder %s331, %s333
      %p340 = scmp.eq.s32.totalorder %s87, 1
      %p341 = por %p339, %p340
      %p342 = scmp.ne.s32.totalorder %s333, %s334
      %p343 = scmp.eq.s32.totalorder %s87, 0
      %p344 = por %p342, %p343
      %p345 = scmp.ne.s32.totalorder %s333, %s334
      %p346 = scmp.eq.s32.totalorder %s88, 1
      %p347 = por %p345, %p346
      %p349 = scmp.ne.s32.totalorder %s334, %s348
      %p350 = scmp.eq.s32.totalorder %s88, 0
      %p351 = por %p349, %p350
      %s353 = sadd.s32 %s352, 1
      %p356 = scmp.eq.s32.totalorder %s82, 1
      %p357 = scmp.ne.s32.totalorder %s352, %s354
      %p358 = scmp.eq.s32.totalorder %s82, 0
      %p359 = por %p357, %p358
      %p360 = scmp.ne.s32.totalorder %s352, %s354
      %p361 = scmp.eq.s32.totalorder %s87, 1
      %p362 = por %p360, %p361
      %p363 = scmp.ne.s32.totalorder %s354, %s355
      %p364 = scmp.eq.s32.totalorder %s87, 0
      %p365 = por %p363, %p364
      %p366 = scmp.ne.s32.totalorder %s354, %s355
      %p367 = scmp.eq.s32.totalorder %s88, 1
      %p368 = por %p366, %p367
      %p370 = scmp.ne.s32.totalorder %s355, %s369
      %p371 = scmp.eq.s32.totalorder %s88, 0
      %p372 = por %p370, %p371
      %s374 = sadd.s32 %s373, 1
      %p377 = scmp.eq.s32.totalorder %s82, 1
      %p378 = scmp.ne.s32.totalorder %s373, %s375
      %p379 = scmp.eq.s32.totalorder %s82, 0
      %p380 = por %p378, %p379
      %p381 = scmp.ne.s32.totalorder %s373, %s375
      %p382 = scmp.eq.s32.totalorder %s87, 1
      %p383 = por %p381, %p382
      %p384 = scmp.ne.s32.totalorder %s375, %s376
      %p385 = scmp.eq.s32.totalorder %s87, 0
      %p386 = por %p384, %p385
      %p387 = scmp.ne.s32.totalorder %s375, %s376
      %p388 = scmp.eq.s32.totalorder %s88, 1
      %p389 = por %p387, %p388
      %p391 = scmp.ne.s32.totalorder %s376, %s390
      %p392 = scmp.eq.s32.totalorder %s88, 0
      %p393 = por %p391, %p392
      %s395 = sadd.s32 %s394, 1
      %p398 = scmp.eq.s32.totalorder %s82, 1
      %p399 = scmp.ne.s32.totalorder %s394, %s396
      %p400 = scmp.eq.s32.totalorder %s82, 0
      %p401 = por %p399, %p400
      %p402 = scmp.ne.s32.totalorder %s394, %s396
      %p403 = scmp.eq.s32.totalorder %s87, 1
      %p404 = por %p402, %p403
      %p405 = scmp.ne.s32.totalorder %s396, %s397
      %p406 = scmp.eq.s32.totalorder %s87, 0
      %p407 = por %p405, %p406
      %p408 = scmp.ne.s32.totalorder %s396, %s397
      %p409 = scmp.eq.s32.totalorder %s88, 1
      %p410 = por %p408, %p409
      %p412 = scmp.ne.s32.totalorder %s397, %s411
      %p413 = scmp.eq.s32.totalorder %s88, 0
      %p414 = por %p412, %p413
      %s416 = sadd.s32 %s415, 1
      %p419 = scmp.eq.s32.totalorder %s82, 1
      %p420 = scmp.ne.s32.totalorder %s415, %s417
      %p421 = scmp.eq.s32.totalorder %s82, 0
      %p422 = por %p420, %p421
      %p423 = scmp.ne.s32.totalorder %s415, %s417
      %p424 = scmp.eq.s32.totalorder %s87, 1
      %p425 = por %p423, %p424
      %p426 = scmp.ne.s32.totalorder %s417, %s418
      %p427 = scmp.eq.s32.totalorder %s87, 0
      %p428 = por %p426, %p427
      %p429 = scmp.ne.s32.totalorder %s417, %s418
      %p430 = scmp.eq.s32.totalorder %s88, 1
      %p431 = por %p429, %p430
      %p433 = scmp.ne.s32.totalorder %s418, %s432
      %p434 = scmp.eq.s32.totalorder %s88, 0
      %p435 = por %p433, %p434
      %s437 = sadd.s32 %s436, 1
      %p440 = scmp.eq.s32.totalorder %s82, 1
      %p441 = scmp.ne.s32.totalorder %s436, %s438
      %p442 = scmp.eq.s32.totalorder %s82, 0
      %p443 = por %p441, %p442
      %p444 = scmp.ne.s32.totalorder %s436, %s438
      %p445 = scmp.eq.s32.totalorder %s87, 1
      %p446 = por %p444, %p445
      %p447 = scmp.ne.s32.totalorder %s438, %s439
      %p448 = scmp.eq.s32.totalorder %s87, 0
      %p449 = por %p447, %p448
      %p450 = scmp.ne.s32.totalorder %s438, %s439
      %p451 = scmp.eq.s32.totalorder %s88, 1
      %p452 = por %p450, %p451
      %p454 = scmp.ne.s32.totalorder %s439, %s453
      %p455 = scmp.eq.s32.totalorder %s88, 0
      %p456 = por %p454, %p455
      %s458 = sadd.s32 %s457, 1
      %p461 = scmp.eq.s32.totalorder %s82, 1
      %p462 = scmp.ne.s32.totalorder %s457, %s459
      %p463 = scmp.eq.s32.totalorder %s82, 0
      %p464 = por %p462, %p463
      %p465 = scmp.ne.s32.totalorder %s457, %s459
      %p466 = scmp.eq.s32.totalorder %s87, 1
      %p467 = por %p465, %p466
      %p468 = scmp.ne.s32.totalorder %s459, %s460
      %p469 = scmp.eq.s32.totalorder %s87, 0
      %p470 = por %p468, %p469
      %p471 = scmp.ne.s32.totalorder %s459, %s460
      %p472 = scmp.eq.s32.totalorder %s88, 1
      %p473 = por %p471, %p472
      %p475 = scmp.ne.s32.totalorder %s460, %s474
      %p476 = scmp.eq.s32.totalorder %s88, 0
      %p477 = por %p475, %p476
      %s479 = sadd.s32 %s478, 1
      %p482 = scmp.eq.s32.totalorder %s82, 1
      %p483 = scmp.ne.s32.totalorder %s478, %s480
      %p484 = scmp.eq.s32.totalorder %s82, 0
      %p485 = por %p483, %p484
      %p486 = scmp.ne.s32.totalorder %s478, %s480
      %p487 = scmp.eq.s32.totalorder %s87, 1
      %p488 = por %p486, %p487
      %p489 = scmp.ne.s32.totalorder %s480, %s481
      %p490 = scmp.eq.s32.totalorder %s87, 0
      %p491 = por %p489, %p490
      %p492 = scmp.ne.s32.totalorder %s480, %s481
      %p493 = scmp.eq.s32.totalorder %s88, 1
      %p494 = por %p492, %p493
      %p496 = scmp.ne.s32.totalorder %s481, %s495
      %p497 = scmp.eq.s32.totalorder %s88, 0
      %p498 = por %p496, %p497
      %s500 = sadd.s32 %s499, 1
      %p503 = scmp.eq.s32.totalorder %s82, 1
      %p504 = scmp.ne.s32.totalorder %s499, %s501
      %p505 = scmp.eq.s32.totalorder %s82, 0
      %p506 = por %p504, %p505
      %p507 = scmp.ne.s32.totalorder %s499, %s501
      %p508 = scmp.eq.s32.totalorder %s87, 1
      %p509 = por %p507, %p508
      %p510 = scmp.ne.s32.totalorder %s501, %s502
      %p511 = scmp.eq.s32.totalorder %s87, 0
      %p512 = por %p510, %p511
      %p513 = scmp.ne.s32.totalorder %s501, %s502
      %p514 = scmp.eq.s32.totalorder %s88, 1
      %p515 = por %p513, %p514
      %p517 = scmp.ne.s32.totalorder %s502, %s516
      %p518 = scmp.eq.s32.totalorder %s88, 0
      %p519 = por %p517, %p518
      %s521 = sadd.s32 %s520, 1
      %p524 = scmp.eq.s32.totalorder %s82, 1
      %p525 = scmp.ne.s32.totalorder %s520, %s522
      %p526 = scmp.eq.s32.totalorder %s82, 0
      %p527 = por %p525, %p526
      %p528 = scmp.ne.s32.totalorder %s520, %s522
      %p529 = scmp.eq.s32.totalorder %s87, 1
      %p530 = por %p528, %p529
      %p531 = scmp.ne.s32.totalorder %s522, %s523
      %p532 = scmp.eq.s32.totalorder %s87, 0
      %p533 = por %p531, %p532
      %p534 = scmp.ne.s32.totalorder %s522, %s523
      %p535 = scmp.eq.s32.totalorder %s88, 1
      %p536 = por %p534, %p535
      %p538 = scmp.ne.s32.totalorder %s523, %s537
      %p539 = scmp.eq.s32.totalorder %s88, 0
      %p540 = por %p538, %p539
      %s542 = sadd.s32 %s541, 1
      %p545 = scmp.eq.s32.totalorder %s82, 1
      %p546 = scmp.ne.s32.totalorder %s541, %s543
      %p547 = scmp.eq.s32.totalorder %s82, 0
      %p548 = por %p546, %p547
      %p549 = scmp.ne.s32.totalorder %s541, %s543
      %p550 = scmp.eq.s32.totalorder %s87, 1
      %p551 = por %p549, %p550
      %p552 = scmp.ne.s32.totalorder %s543, %s544
      %p553 = scmp.eq.s32.totalorder %s87, 0
      %p554 = por %p552, %p553
      %p555 = scmp.ne.s32.totalorder %s543, %s544
      %p556 = scmp.eq.s32.totalorder %s88, 1
      %p557 = por %p555, %p556
      %p559 = scmp.ne.s32.totalorder %s544, %s558
      %p560 = scmp.eq.s32.totalorder %s88, 0
      %p561 = por %p559, %p560
      %s563 = sadd.s32 %s562, 1
      %p566 = scmp.eq.s32.totalorder %s82, 1
      %p567 = scmp.ne.s32.totalorder %s562, %s564
      %p568 = scmp.eq.s32.totalorder %s82, 0
      %p569 = por %p567, %p568
      %p570 = scmp.ne.s32.totalorder %s562, %s564
      %p571 = scmp.eq.s32.totalorder %s87, 1
      %p572 = por %p570, %p571
      %p573 = scmp.ne.s32.totalorder %s564, %s565
      %p574 = scmp.eq.s32.totalorder %s87, 0
      %p575 = por %p573, %p574
      %p576 = scmp.ne.s32.totalorder %s564, %s565
      %p577 = scmp.eq.s32.totalorder %s88, 1
      %p578 = por %p576, %p577
      %p580 = scmp.ne.s32.totalorder %s565, %s579
      %p581 = scmp.eq.s32.totalorder %s88, 0
      %p582 = por %p580, %p581
      %s584 = sadd.s32 %s583, 1
      %p587 = scmp.eq.s32.totalorder %s82, 1
      %p588 = scmp.ne.s32.totalorder %s583, %s585
      %p589 = scmp.eq.s32.totalorder %s82, 0
      %p590 = por %p588, %p589
      %p591 = scmp.ne.s32.totalorder %s583, %s585
      %p592 = scmp.eq.s32.totalorder %s87, 1
      %p593 = por %p591, %p592
      %p594 = scmp.ne.s32.totalorder %s585, %s586
      %p595 = scmp.eq.s32.totalorder %s87, 0
      %p596 = por %p594, %p595
      %p597 = scmp.ne.s32.totalorder %s585, %s586
      %p598 = scmp.eq.s32.totalorder %s88, 1
      %p599 = por %p597, %p598
      %p601 = scmp.ne.s32.totalorder %s586, %s600
      %p602 = scmp.eq.s32.totalorder %s88, 0
      %p603 = por %p601, %p602
      %s605 = sadd.s32 %s604, 1
      %p608 = scmp.eq.s32.totalorder %s82, 1
      %p609 = scmp.ne.s32.totalorder %s604, %s606
      %p610 = scmp.eq.s32.totalorder %s82, 0
      %p611 = por %p609, %p610
      %p612 = scmp.ne.s32.totalorder %s604, %s606
      %p613 = scmp.eq.s32.totalorder %s87, 1
      %p614 = por %p612, %p613
      %p615 = scmp.ne.s32.totalorder %s606, %s607
      %p616 = scmp.eq.s32.totalorder %s87, 0
      %p617 = por %p615, %p616
      %p618 = scmp.ne.s32.totalorder %s606, %s607
      %p619 = scmp.eq.s32.totalorder %s88, 1
      %p620 = por %p618, %p619
      %p622 = scmp.ne.s32.totalorder %s607, %s621
      %p623 = scmp.eq.s32.totalorder %s88, 0
      %p624 = por %p622, %p623
      %s626 = sadd.s32 %s625, 1
      %p629 = scmp.eq.s32.totalorder %s82, 1
      %p630 = scmp.ne.s32.totalorder %s625, %s627
      %p631 = scmp.eq.s32.totalorder %s82, 0
      %p632 = por %p630, %p631
      %p633 = scmp.ne.s32.totalorder %s625, %s627
      %p634 = scmp.eq.s32.totalorder %s87, 1
      %p635 = por %p633, %p634
      %p636 = scmp.ne.s32.totalorder %s627, %s628
      %p637 = scmp.eq.s32.totalorder %s87, 0
      %p638 = por %p636, %p637
      %p639 = scmp.ne.s32.totalorder %s627, %s628
      %p640 = scmp.eq.s32.totalorder %s88, 1
      %p641 = por %p639, %p640
      %p643 = scmp.ne.s32.totalorder %s628, %s642
      %p644 = scmp.eq.s32.totalorder %s88, 0
      %p645 = por %p643, %p644
      %s647 = sadd.s32 %s646, 1
      %p650 = scmp.eq.s32.totalorder %s82, 1
      %p651 = scmp.ne.s32.totalorder %s646, %s648
      %p652 = scmp.eq.s32.totalorder %s82, 0
      %p653 = por %p651, %p652
      %p654 = scmp.ne.s32.totalorder %s646, %s648
      %p655 = scmp.eq.s32.totalorder %s87, 1
      %p656 = por %p654, %p655
      %p657 = scmp.ne.s32.totalorder %s648, %s649
      %p658 = scmp.eq.s32.totalorder %s87, 0
      %p659 = por %p657, %p658
      %p660 = scmp.ne.s32.totalorder %s648, %s649
      %p661 = scmp.eq.s32.totalorder %s88, 1
      %p662 = por %p660, %p661
      %p664 = scmp.ne.s32.totalorder %s649, %s663
      %p665 = scmp.eq.s32.totalorder %s88, 0
      %p666 = por %p664, %p665
      %s668 = sadd.s32 %s667, 1
      %p671 = scmp.eq.s32.totalorder %s82, 1
      %p672 = scmp.ne.s32.totalorder %s667, %s669
      %p673 = scmp.eq.s32.totalorder %s82, 0
      %p674 = por %p672, %p673
      %p675 = scmp.ne.s32.totalorder %s667, %s669
      %p676 = scmp.eq.s32.totalorder %s87, 1
      %p677 = por %p675, %p676
      %p678 = scmp.ne.s32.totalorder %s669, %s670
      %p679 = scmp.eq.s32.totalorder %s87, 0
      %p680 = por %p678, %p679
      %p681 = scmp.ne.s32.totalorder %s669, %s670
      %p682 = scmp.eq.s32.totalorder %s88, 1
      %p683 = por %p681, %p682
      %p685 = scmp.ne.s32.totalorder %s670, %s684
      %p686 = scmp.eq.s32.totalorder %s88, 0
      %p687 = por %p685, %p686
      %s689 = sadd.s32 %s688, 1
      %p692 = scmp.eq.s32.totalorder %s82, 1
      %p693 = scmp.ne.s32.totalorder %s688, %s690
      %p694 = scmp.eq.s32.totalorder %s82, 0
      %p695 = por %p693, %p694
      %p696 = scmp.ne.s32.totalorder %s688, %s690
      %p697 = scmp.eq.s32.totalorder %s87, 1
      %p698 = por %p696, %p697
      %p699 = scmp.ne.s32.totalorder %s690, %s691
      %p700 = scmp.eq.s32.totalorder %s87, 0
      %p701 = por %p699, %p700
      %p702 = scmp.ne.s32.totalorder %s690, %s691
      %p703 = scmp.eq.s32.totalorder %s88, 1
      %p704 = por %p702, %p703
      %p706 = scmp.ne.s32.totalorder %s691, %s705
      %p707 = scmp.eq.s32.totalorder %s88, 0
      %p708 = por %p706, %p707
      %s710 = sadd.s32 %s709, 1
      %p713 = scmp.eq.s32.totalorder %s82, 1
      %p714 = scmp.ne.s32.totalorder %s709, %s711
      %p715 = scmp.eq.s32.totalorder %s82, 0
      %p716 = por %p714, %p715
      %p717 = scmp.ne.s32.totalorder %s709, %s711
      %p718 = scmp.eq.s32.totalorder %s87, 1
      %p719 = por %p717, %p718
      %p720 = scmp.ne.s32.totalorder %s711, %s712
      %p721 = scmp.eq.s32.totalorder %s87, 0
      %p722 = por %p720, %p721
      %p723 = scmp.ne.s32.totalorder %s711, %s712
      %p724 = scmp.eq.s32.totalorder %s88, 1
      %p725 = por %p723, %p724
      %p727 = scmp.ne.s32.totalorder %s712, %s726
      %p728 = scmp.eq.s32.totalorder %s88, 0
      %p729 = por %p727, %p728
      %s731 = sadd.s32 %s730, 1
      %p734 = scmp.eq.s32.totalorder %s82, 1
      %p735 = scmp.ne.s32.totalorder %s730, %s732
      %p736 = scmp.eq.s32.totalorder %s82, 0
      %p737 = por %p735, %p736
      %p738 = scmp.ne.s32.totalorder %s730, %s732
      %p739 = scmp.eq.s32.totalorder %s87, 1
      %p740 = por %p738, %p739
      %p741 = scmp.ne.s32.totalorder %s732, %s733
      %p742 = scmp.eq.s32.totalorder %s87, 0
      %p743 = por %p741, %p742
      %p744 = scmp.ne.s32.totalorder %s732, %s733
      %p745 = scmp.eq.s32.totalorder %s88, 1
      %p746 = por %p744, %p745
      %p748 = scmp.ne.s32.totalorder %s733, %s747
      %p749 = scmp.eq.s32.totalorder %s88, 0
      %p750 = por %p748, %p749
      %s752 = sadd.s32 %s751, 1
      %p755 = scmp.eq.s32.totalorder %s82, 1
      %p756 = scmp.ne.s32.totalorder %s751, %s753
      %p757 = scmp.eq.s32.totalorder %s82, 0
      %p758 = por %p756, %p757
      %p759 = scmp.ne.s32.totalorder %s751, %s753
      %p760 = scmp.eq.s32.totalorder %s87, 1
      %p761 = por %p759, %p760
      %p762 = scmp.ne.s32.totalorder %s753, %s754
      %p763 = scmp.eq.s32.totalorder %s87, 0
      %p764 = por %p762, %p763
      %p765 = scmp.ne.s32.totalorder %s753, %s754
      %p766 = scmp.eq.s32.totalorder %s88, 1
      %p767 = por %p765, %p766
      %p769 = scmp.ne.s32.totalorder %s754, %s768
      %p770 = scmp.eq.s32.totalorder %s88, 0
      %p771 = por %p769, %p770
      %s772 = ssub.s32 %s82, %s89
      %p773 = scmp.eq.s32.totalorder %s772, 0
      %s775 = sadd.s32 %s774, 1
      %s776 = scalar_select %p773, %s774, %s775
      %p779 = pneg %p773
      %p780 = scmp.eq.s32.totalorder %s82, 1
      %p781 = por %p779, %p780
      %p782 = scmp.ne.s32.totalorder %s774, %s777
      %p783 = scmp.eq.s32.totalorder %s82, 0
      %p784 = por %p782, %p783
      %p785 = scmp.ne.s32.totalorder %s774, %s777
      %p786 = scmp.eq.s32.totalorder %s87, 1
      %p787 = por %p785, %p786
      %p788 = scmp.ne.s32.totalorder %s777, %s778
      %p789 = scmp.eq.s32.totalorder %s87, 0
      %p790 = por %p788, %p789
      %p791 = scmp.ne.s32.totalorder %s777, %s778
      %p792 = scmp.eq.s32.totalorder %s88, 1
      %p793 = por %p791, %p792
      %p795 = scmp.ne.s32.totalorder %s778, %s794
      %p796 = scmp.eq.s32.totalorder %s88, 0
      %p797 = por %p795, %p796
      %p798 = scmp.le.s32.totalorder 1, %s82
      %p799 = scmp.lt.s32.totalorder %s82, 3
      %p800 = pnand %p798, %p799
      %p801 = pneg %p800
      // Predicated region
      $region9: #{tpu_custom_call.1} parent=5 // pred_check
        _
      $region10: #{tpu_custom_call.1} parent=5 // pred_check_branch
        %803 = sbr.rel (%p800) target = $region12
      $region11: #{tpu_custom_call.1} parent=5 // pred_region
        %s804 = ssub.s32 %s82, 1
        // Predicated region
        $region13: #{tpu_custom_call.1} parent=11 // pred_check
          %p805 = pneg %p155
        $region14: #{tpu_custom_call.1} parent=11 // pred_check_branch
          %807 = sbr.rel (%p805) target = $region16
        $region15: #{tpu_custom_call.1} parent=11 // pred_region
          %809 = vsyncadd [#allocation6], 0
          %s811 = sshll.u32 %s5, 4
          %s812 = int_to_ptr.hbm [resolvable:$true] %s811
          %s813 = sshll.u32 [#allocation7], 4
          %s814 = int_to_ptr.vmem [resolvable:$true] %s813
          %816 = dma.hbm_to_vmem [thread:$0]  %s812, 16, %s814, [#allocation6]
        $region16: #{tpu_custom_call.1} parent=11 // pred_fallthru
          _
        // Predicated region
        $region17: #{tpu_custom_call.1} parent=11 // pred_check
          %p817 = pneg %p176
        $region18: #{tpu_custom_call.1} parent=11 // pred_check_branch
          %819 = sbr.rel (%p817) target = $region20
        $region19: #{tpu_custom_call.1} parent=11 // pred_region
          _
        $region20: #{tpu_custom_call.1} parent=11 // pred_fallthru
          _
        // Predicated region
        $region21: #{tpu_custom_call.1} parent=11 // pred_check
          %p820 = pneg %p197
        $region22: #{tpu_custom_call.1} parent=11 // pred_check_branch
          %822 = sbr.rel (%p820) target = $region24
        $region23: #{tpu_custom_call.1} parent=11 // pred_region
          _
        $region24: #{tpu_custom_call.1} parent=11 // pred_fallthru
          _
        // Predicated region
        $region25: #{tpu_custom_call.1} parent=11 // pred_check
          %p823 = pneg %p218
        $region26: #{tpu_custom_call.1} parent=11 // pred_check_branch
          %825 = sbr.rel (%p823) target = $region28
        $region27: #{tpu_custom_call.1} parent=11 // pred_region
          _
        $region28: #{tpu_custom_call.1} parent=11 // pred_fallthru
          _
        // Predicated region
        $region29: #{tpu_custom_call.1} parent=11 // pred_check
          %p826 = pneg %p239
        $region30: #{tpu_custom_call.1} parent=11 // pred_check_branch
          %828 = sbr.rel (%p826) target = $region32
        $region31: #{tpu_custom_call.1} parent=11 // pred_region
          _
        $region32: #{tpu_custom_call.1} parent=11 // pred_fallthru
          _
        // Predicated region
        $region33: #{tpu_custom_call.1} parent=11 // pred_check
          %p829 = pneg %p260
        $region34: #{tpu_custom_call.1} parent=11 // pred_check_branch
          %831 = sbr.rel (%p829) target = $region36
        $region35: #{tpu_custom_call.1} parent=11 // pred_region
          _
        $region36: #{tpu_custom_call.1} parent=11 // pred_fallthru
          _
        // Predicated region
        $region37: #{tpu_custom_call.1} parent=11 // pred_check
          %p832 = pneg %p281
        $region38: #{tpu_custom_call.1} parent=11 // pred_check_branch
          %834 = sbr.rel (%p832) target = $region40
        $region39: #{tpu_custom_call.1} parent=11 // pred_region
          _
        $region40: #{tpu_custom_call.1} parent=11 // pred_fallthru
          _
        // Predicated region
        $region41: #{tpu_custom_call.1} parent=11 // pred_check
          %p835 = pneg %p302
        $region42: #{tpu_custom_call.1} parent=11 // pred_check_branch
          %837 = sbr.rel (%p835) target = $region44
        $region43: #{tpu_custom_call.1} parent=11 // pred_region
          _
        $region44: #{tpu_custom_call.1} parent=11 // pred_fallthru
          _
        // Predicated region
        $region45: #{tpu_custom_call.1} parent=11 // pred_check
          %p838 = pneg %p323
        $region46: #{tpu_custom_call.1} parent=11 // pred_check_branch
          %840 = sbr.rel (%p838) target = $region48
        $region47: #{tpu_custom_call.1} parent=11 // pred_region
          _
        $region48: #{tpu_custom_call.1} parent=11 // pred_fallthru
          _
        // Predicated region
        $region49: #{tpu_custom_call.1} parent=11 // pred_check
          %p841 = pneg %p344
        $region50: #{tpu_custom_call.1} parent=11 // pred_check_branch
          %843 = sbr.rel (%p841) target = $region52
        $region51: #{tpu_custom_call.1} parent=11 // pred_region
          _
        $region52: #{tpu_custom_call.1} parent=11 // pred_fallthru
          _
        // Predicated region
        $region53: #{tpu_custom_call.1} parent=11 // pred_check
          %p844 = pneg %p365
        $region54: #{tpu_custom_call.1} parent=11 // pred_check_branch
          %846 = sbr.rel (%p844) target = $region56
        $region55: #{tpu_custom_call.1} parent=11 // pred_region
          _
        $region56: #{tpu_custom_call.1} parent=11 // pred_fallthru
          _
        // Predicated region
        $region57: #{tpu_custom_call.1} parent=11 // pred_check
          %p847 = pneg %p386
        $region58: #{tpu_custom_call.1} parent=11 // pred_check_branch
          %849 = sbr.rel (%p847) target = $region60
        $region59: #{tpu_custom_call.1} parent=11 // pred_region
          _
        $region60: #{tpu_custom_call.1} parent=11 // pred_fallthru
          _
        // Predicated region
        $region61: #{tpu_custom_call.1} parent=11 // pred_check
          %p850 = pneg %p407
        $region62: #{tpu_custom_call.1} parent=11 // pred_check_branch
          %852 = sbr.rel (%p850) target = $region64
        $region63: #{tpu_custom_call.1} parent=11 // pred_region
          _
        $region64: #{tpu_custom_call.1} parent=11 // pred_fallthru
          _
        // Predicated region
        $region65: #{tpu_custom_call.1} parent=11 // pred_check
          %p853 = pneg %p428
        $region66: #{tpu_custom_call.1} parent=11 // pred_check_branch
          %855 = sbr.rel (%p853) target = $region68
        $region67: #{tpu_custom_call.1} parent=11 // pred_region
          _
        $region68: #{tpu_custom_call.1} parent=11 // pred_fallthru
          _
        // Predicated region
        $region69: #{tpu_custom_call.1} parent=11 // pred_check
          %p856 = pneg %p449
        $region70: #{tpu_custom_call.1} parent=11 // pred_check_branch
          %858 = sbr.rel (%p856) target = $region72
        $region71: #{tpu_custom_call.1} parent=11 // pred_region
          _
        $region72: #{tpu_custom_call.1} parent=11 // pred_fallthru
          _
        // Predicated region
        $region73: #{tpu_custom_call.1} parent=11 // pred_check
          %p859 = pneg %p470
        $region74: #{tpu_custom_call.1} parent=11 // pred_check_branch
          %861 = sbr.rel (%p859) target = $region76
        $region75: #{tpu_custom_call.1} parent=11 // pred_region
          _
        $region76: #{tpu_custom_call.1} parent=11 // pred_fallthru
          _
        // Predicated region
        $region77: #{tpu_custom_call.1} parent=11 // pred_check
          %p862 = pneg %p491
        $region78: #{tpu_custom_call.1} parent=11 // pred_check_branch
          %864 = sbr.rel (%p862) target = $region80
        $region79: #{tpu_custom_call.1} parent=11 // pred_region
          _
        $region80: #{tpu_custom_call.1} parent=11 // pred_fallthru
          _
        // Predicated region
        $region81: #{tpu_custom_call.1} parent=11 // pred_check
          %p865 = pneg %p512
        $region82: #{tpu_custom_call.1} parent=11 // pred_check_branch
          %867 = sbr.rel (%p865) target = $region84
        $region83: #{tpu_custom_call.1} parent=11 // pred_region
          _
        $region84: #{tpu_custom_call.1} parent=11 // pred_fallthru
          _
        // Predicated region
        $region85: #{tpu_custom_call.1} parent=11 // pred_check
          %p868 = pneg %p533
        $region86: #{tpu_custom_call.1} parent=11 // pred_check_branch
          %870 = sbr.rel (%p868) target = $region88
        $region87: #{tpu_custom_call.1} parent=11 // pred_region
          _
        $region88: #{tpu_custom_call.1} parent=11 // pred_fallthru
          _
        // Predicated region
        $region89: #{tpu_custom_call.1} parent=11 // pred_check
          %p871 = pneg %p554
        $region90: #{tpu_custom_call.1} parent=11 // pred_check_branch
          %873 = sbr.rel (%p871) target = $region92
        $region91: #{tpu_custom_call.1} parent=11 // pred_region
          _
        $region92: #{tpu_custom_call.1} parent=11 // pred_fallthru
          _
        // Predicated region
        $region93: #{tpu_custom_call.1} parent=11 // pred_check
          %p874 = pneg %p575
        $region94: #{tpu_custom_call.1} parent=11 // pred_check_branch
          %876 = sbr.rel (%p874) target = $region96
        $region95: #{tpu_custom_call.1} parent=11 // pred_region
          %878 = vsyncadd [#allocation9], 0
          %s879 = sshll.u32 %s45, 4
          %s880 = int_to_ptr.hbm [resolvable:$true] %s879
          %s881 = sshll.u32 [#allocation8], 4
          %s882 = int_to_ptr.vmem [resolvable:$true] %s881
          %887 = dma.hbm_to_vmem [thread:$0]  %s880, 512, %s882, [#allocation9], 128, 128, 8
        $region96: #{tpu_custom_call.1} parent=11 // pred_fallthru
          _
        // Predicated region
        $region97: #{tpu_custom_call.1} parent=11 // pred_check
          %p888 = pneg %p596
        $region98: #{tpu_custom_call.1} parent=11 // pred_check_branch
          %890 = sbr.rel (%p888) target = $region100
        $region99: #{tpu_custom_call.1} parent=11 // pred_region
          _
        $region100: #{tpu_custom_call.1} parent=11 // pred_fallthru
          _
        // Predicated region
        $region101: #{tpu_custom_call.1} parent=11 // pred_check
          %p891 = pneg %p617
        $region102: #{tpu_custom_call.1} parent=11 // pred_check_branch
          %893 = sbr.rel (%p891) target = $region104
        $region103: #{tpu_custom_call.1} parent=11 // pred_region
          _
        $region104: #{tpu_custom_call.1} parent=11 // pred_fallthru
          _
        // Predicated region
        $region105: #{tpu_custom_call.1} parent=11 // pred_check
          %p894 = pneg %p638
        $region106: #{tpu_custom_call.1} parent=11 // pred_check_branch
          %896 = sbr.rel (%p894) target = $region108
        $region107: #{tpu_custom_call.1} parent=11 // pred_region
          _
        $region108: #{tpu_custom_call.1} parent=11 // pred_fallthru
          _
        // Predicated region
        $region109: #{tpu_custom_call.1} parent=11 // pred_check
          %p897 = pneg %p659
        $region110: #{tpu_custom_call.1} parent=11 // pred_check_branch
          %899 = sbr.rel (%p897) target = $region112
        $region111: #{tpu_custom_call.1} parent=11 // pred_region
          _
        $region112: #{tpu_custom_call.1} parent=11 // pred_fallthru
          _
        // Predicated region
        $region113: #{tpu_custom_call.1} parent=11 // pred_check
          %p900 = pneg %p680
        $region114: #{tpu_custom_call.1} parent=11 // pred_check_branch
          %902 = sbr.rel (%p900) target = $region116
        $region115: #{tpu_custom_call.1} parent=11 // pred_region
          _
        $region116: #{tpu_custom_call.1} parent=11 // pred_fallthru
          _
        // Predicated region
        $region117: #{tpu_custom_call.1} parent=11 // pred_check
          %p903 = pneg %p701
        $region118: #{tpu_custom_call.1} parent=11 // pred_check_branch
          %905 = sbr.rel (%p903) target = $region120
        $region119: #{tpu_custom_call.1} parent=11 // pred_region
          %907 = vsyncadd [#allocation9], 0
          %s908 = sshll.u32 %s57, 4
          %s909 = int_to_ptr.hbm [resolvable:$true] %s908
          %s910 = sshll.u32 [#allocation10], 4
          %s911 = int_to_ptr.vmem [resolvable:$true] %s910
          %916 = dma.hbm_to_vmem [thread:$0]  %s909, 512, %s911, [#allocation9], 128, 128, 8
        $region120: #{tpu_custom_call.1} parent=11 // pred_fallthru
          _
        // Predicated region
        $region121: #{tpu_custom_call.1} parent=11 // pred_check
          %p917 = pneg %p722
        $region122: #{tpu_custom_call.1} parent=11 // pred_check_branch
          %919 = sbr.rel (%p917) target = $region124
        $region123: #{tpu_custom_call.1} parent=11 // pred_region
          _
        $region124: #{tpu_custom_call.1} parent=11 // pred_fallthru
          _
        // Predicated region
        $region125: #{tpu_custom_call.1} parent=11 // pred_check
          %p920 = pneg %p743
        $region126: #{tpu_custom_call.1} parent=11 // pred_check_branch
          %922 = sbr.rel (%p920) target = $region128
        $region127: #{tpu_custom_call.1} parent=11 // pred_region
          %924 = vsyncadd [#allocation12], 0
          %s925 = sshll.u32 %s61, 4
          %s926 = int_to_ptr.hbm [resolvable:$true] %s925
          %s927 = sshll.u32 [#allocation11], 4
          %s928 = int_to_ptr.vmem [resolvable:$true] %s927
          %933 = dma.hbm_to_vmem [thread:$0]  %s926, 512, %s928, [#allocation12], 128, 128, 8
        $region128: #{tpu_custom_call.1} parent=11 // pred_fallthru
          _
        // Predicated region
        $region129: #{tpu_custom_call.1} parent=11 // pred_check
          %p934 = pneg %p764
        $region130: #{tpu_custom_call.1} parent=11 // pred_check_branch
          %936 = sbr.rel (%p934) target = $region132
        $region131: #{tpu_custom_call.1} parent=11 // pred_region
          _
        $region132: #{tpu_custom_call.1} parent=11 // pred_fallthru
          _
      $region12: #{tpu_custom_call.1} parent=5 // pred_fallthru
        _
      %p937 = scmp.lt.s32.totalorder %s82, 2
      // Predicated region
      $region133: #{tpu_custom_call.1} parent=5 // pred_check
        %p938 = pneg %p937
      $region134: #{tpu_custom_call.1} parent=5 // pred_check_branch
        %940 = sbr.rel (%p938) target = $region136
      $region135: #{tpu_custom_call.1} parent=5 // pred_region
        // Predicated region
        $region137: #{tpu_custom_call.1} parent=135 // pred_check
          %p941 = pneg %p102
        $region138: #{tpu_custom_call.1} parent=135 // pred_check_branch
          %943 = sbr.rel (%p941) target = $region140
        $region139: #{tpu_custom_call.1} parent=135 // pred_region
          %s944 = sand.u32 %s92, 1
          %s945 = scalar_lea.sflag [#allocation3], %s944
          %s946 = sand.u32 %s92, 1
          %s947 = smul.addr %s946, 8
          %s948 = scalar_lea.vmem [#allocation2], %s947
          %950 = vsyncadd %s945, 0
          %s951 = smul.addr %s82, 8
          %s952 = scalar_lea.hbm %s1, %s951
          %s954 = sshll.u32 %s952, 4
          %s955 = int_to_ptr.hbm [resolvable:$true] %s954
          %s956 = sshll.u32 %s948, 4
          %s957 = int_to_ptr.vmem [resolvable:$true] %s956
          %959 = dma.hbm_to_vmem [thread:$0]  %s955, 128, %s957, %s945
        $region140: #{tpu_custom_call.1} parent=135 // pred_fallthru
          _
        // Predicated region
        $region141: #{tpu_custom_call.1} parent=135 // pred_check
          %p960 = pneg %p128
        $region142: #{tpu_custom_call.1} parent=135 // pred_check_branch
          %962 = sbr.rel (%p960) target = $region144
        $region143: #{tpu_custom_call.1} parent=135 // pred_region
          %s963 = sand.u32 %s82, 1
          %s964 = scalar_lea.sflag [#allocation6], %s963
          %s965 = sand.u32 %s118, 1
          %s966 = scalar_lea.vmem [#allocation5], %s965
          %968 = vsyncadd %s964, 0
          %s969 = scalar_lea.hbm %s3, %s82
          %s971 = sshll.u32 %s969, 4
          %s972 = int_to_ptr.hbm [resolvable:$true] %s971
          %s973 = sshll.u32 %s966, 4
          %s974 = int_to_ptr.vmem [resolvable:$true] %s973
          %976 = dma.hbm_to_vmem [thread:$0]  %s972, 16, %s974, %s964
        $region144: #{tpu_custom_call.1} parent=135 // pred_fallthru
          _
      $region136: #{tpu_custom_call.1} parent=5 // pred_fallthru
        _
      %p977 = scmp.le.s32.totalorder 1, %s82
      %p978 = scmp.lt.s32.totalorder %s82, 3
      %p979 = pnand %p977, %p978
      %p980 = pneg %p979
      // Predicated region
      $region145: #{tpu_custom_call.1} parent=5 // pred_check
        _
      $region146: #{tpu_custom_call.1} parent=5 // pred_check_branch
        %982 = sbr.rel (%p979) target = $region148
      $region147: #{tpu_custom_call.1} parent=5 // pred_region
        %s983 = ssub.s32 %s82, 1
        %s984 = sand.u32 %s95, 1
        %s985 = scalar_lea.sflag [#allocation3], %s984
        %s986 = sand.u32 %s95, 1
        %s987 = smul.addr %s986, 8
        %s988 = scalar_lea.vmem [#allocation2], %s987
        // Predicated region
        $region149: #{tpu_custom_call.1} parent=147 // pred_check
          %p989 = pneg %p108
        $region150: #{tpu_custom_call.1} parent=147 // pred_check_branch
          %991 = sbr.rel (%p989) target = $region152
        $region151: #{tpu_custom_call.1} parent=147 // pred_region
          %993 = dma.done %s985, 128
        $region152: #{tpu_custom_call.1} parent=147 // pred_fallthru
          _
        %s994 = sand.u32 %s87, 1
        %s995 = scalar_lea.sflag [#allocation6], %s994
        %s996 = sand.u32 %s121, 1
        %s997 = scalar_lea.vmem [#allocation5], %s996
        // Predicated region
        $region153: #{tpu_custom_call.1} parent=147 // pred_check
          %p998 = pneg %p134
        $region154: #{tpu_custom_call.1} parent=147 // pred_check_branch
          %1000 = sbr.rel (%p998) target = $region156
        $region155: #{tpu_custom_call.1} parent=147 // pred_region
          %1002 = dma.done %s995, 16
        $region156: #{tpu_custom_call.1} parent=147 // pred_fallthru
          _
        // Predicated region
        $region157: #{tpu_custom_call.1} parent=147 // pred_check
          %p1003 = pneg %p155
        $region158: #{tpu_custom_call.1} parent=147 // pred_check_branch
          %1005 = sbr.rel (%p1003) target = $region160
        $region159: #{tpu_custom_call.1} parent=147 // pred_region
          %1007 = dma.done [#allocation6], 16
        $region160: #{tpu_custom_call.1} parent=147 // pred_fallthru
          _
        // Predicated region
        $region161: #{tpu_custom_call.1} parent=147 // pred_check
          %p1008 = pneg %p575
        $region162: #{tpu_custom_call.1} parent=147 // pred_check_branch
          %1010 = sbr.rel (%p1008) target = $region164
        $region163: #{tpu_custom_call.1} parent=147 // pred_region
          %1012 = dma.done [#allocation9], 512
        $region164: #{tpu_custom_call.1} parent=147 // pred_fallthru
          _
        // Predicated region
        $region165: #{tpu_custom_call.1} parent=147 // pred_check
          %p1013 = pneg %p701
        $region166: #{tpu_custom_call.1} parent=147 // pred_check_branch
          %1015 = sbr.rel (%p1013) target = $region168
        $region167: #{tpu_custom_call.1} parent=147 // pred_region
          %1017 = dma.done [#allocation9], 512
        $region168: #{tpu_custom_call.1} parent=147 // pred_fallthru
          _
        // Predicated region
        $region169: #{tpu_custom_call.1} parent=147 // pred_check
          %p1018 = pneg %p743
        $region170: #{tpu_custom_call.1} parent=147 // pred_check_branch
          %1020 = sbr.rel (%p1018) target = $region172
        $region171: #{tpu_custom_call.1} parent=147 // pred_region
          %1022 = dma.done [#allocation12], 512
        $region172: #{tpu_custom_call.1} parent=147 // pred_fallthru
          _
        %s1023 = sand.u32 %s95, 1
        %s1024 = scalar_lea.sflag [#allocation3], %s1023
        %s1025 = sand.u32 %s95, 1
        %s1026 = smul.addr %s1025, 8
        %s1027 = scalar_lea.vmem [#allocation2], %s1026
        %p1028 = pneg %p108
        %p1029 = pneg %p105
        %s1030 = sand.u32 %s87, 1
        %s1031 = scalar_lea.sflag [#allocation6], %s1030
        %s1032 = sand.u32 %s121, 1
        %s1033 = scalar_lea.vmem [#allocation5], %s1032
        %p1034 = pneg %p134
        %p1035 = pneg %p131
        %p1036 = pneg %p155
        %p1037 = pneg %p152
        %p1038 = pneg %p176
        %p1039 = pneg %p173
        %p1040 = pneg %p197
        %p1041 = pneg %p194
        %p1042 = pneg %p218
        %p1043 = pneg %p215
        %p1044 = pneg %p239
        %p1045 = pneg %p236
        %p1046 = pneg %p260
        %p1047 = pneg %p257
        %p1048 = pneg %p281
        %p1049 = pneg %p278
        %p1050 = pneg %p302
        %p1051 = pneg %p299
        %p1052 = pneg %p323
        %p1053 = pneg %p320
        %p1054 = pneg %p344
        %p1055 = pneg %p341
        %p1056 = pneg %p365
        %p1057 = pneg %p362
        %p1058 = pneg %p386
        %p1059 = pneg %p383
        %p1060 = pneg %p407
        %p1061 = pneg %p404
        %p1062 = pneg %p428
        %p1063 = pneg %p425
        %p1064 = pneg %p449
        %p1065 = pneg %p446
        %p1066 = pneg %p470
        %p1067 = pneg %p467
        %p1068 = pneg %p491
        %p1069 = pneg %p488
        %p1070 = pneg %p512
        %p1071 = pneg %p509
        %p1072 = pneg %p533
        %p1073 = pneg %p530
        %p1074 = pneg %p554
        %p1075 = pneg %p551
        %p1076 = pneg %p575
        %p1077 = pneg %p572
        %p1078 = pneg %p596
        %p1079 = pneg %p593
        %p1080 = pneg %p617
        %p1081 = pneg %p614
        %p1082 = pneg %p638
        %p1083 = pneg %p635
        %p1084 = pneg %p659
        %p1085 = pneg %p656
        %p1086 = pneg %p680
        %p1087 = pneg %p677
        %p1088 = pneg %p701
        %p1089 = pneg %p698
        %p1090 = pneg %p722
        %p1091 = pneg %p719
        %p1092 = pneg %p743
        %p1093 = pneg %p740
        %p1094 = pneg %p764
        %p1095 = pneg %p761
        %p1096 = pneg %p790
        %p1097 = pneg %p787
        %s1098 = sand.u32 %s777, 1
        %s1099 = scalar_lea.sflag [#allocation4], %s1098
        %s1100 = sand.u32 %s777, 1
        %s1101 = scalar_lea.vmem [#allocation13], %s1100
        %v1102 = vld [vmem:[%s997] sm:$0x1]
        %v1103 = vld [vmem:[%s988] sm:$0xff]
        %v1104 = vld [vmem:[#allocation7] sm:$0x1]
        %v1105 = vld [vmem:[%s7] sm:$0x1]
        %vm1106 = vcmask 261120
        %v1107 = vsel %vm1106, %v1103, 0.0
        %1108 = vadd.xlane.f32.xlu0 %v1107
        %v1109 = vpop.xlane.xlu0 %1108
        %v1110 = vrcp.pop 32.0
        %v1111 = vmul.f32 32.0, %v1110
        %v1112 = vsub.f32 1.0, %v1111
        %v1113 = vmul.f32 %v1110, %v1112
        %v1114 = vadd.f32 %v1110, %v1113
        %vm1115 = vweird.f32 %v1110
        %v1116 = vsel %vm1115, %v1110, %v1114
        %v1117 = vmul.f32 %v1109, %v1116
        %v1118 = vsub.f32 %v1103, %v1117
        %v1119 = vmul.f32 %v1118, %v1118
        %v1120 = vsel %vm1106, %v1119, 0.0
        %1121 = vadd.xlane.f32.xlu0 %v1120
        %v1122 = vpop.xlane.xlu0 %1121
        %v1123 = vmul.f32 %v1122, %v1116
        %v1124 = vadd.f32 %v1123, 1e-12
        %v1125 = vrsqrt.pop %v1124
        %v1126 = vmul.f32 %v1125, %v1124
        %v1127 = vmul.f32 %v1126, %v1125
        %v1128 = vmul.f32 0.5, %v1127
        %v1129 = vsub.f32 1.5, %v1128
        %v1130 = vmul.f32 %v1125, %v1129
        %vm1131 = vweird.f32 %v1124
        %vm1132 = vweird.f32 %v1125
        %vm1133 = vmor %vm1131, %vm1132
        %v1134 = vsel %vm1133, %v1125, %v1130
        %v1135 = vmul.f32 %v1118, %v1134
        %v1137 = vperm.slane %v1104, 0
        %v1139 = vmul.f32 %v1135, %v1137
        %v1141 = vperm.slane %v1105, 0
        %v1143 = vadd.f32 %v1139, %v1141
        %v1144 = vld [vmem:[%s9] sm:$0xff]
        %v1145 = vld [vmem:[%s9 + $0x8] sm:$0xff]
        %v1146 = vld [vmem:[%s9 + $0x10] sm:$0xff]
        %v1147 = vld [vmem:[%s9 + $0x18] sm:$0xff]
        %v1148 = vld [vmem:[%s11] sm:$0x1]
        %v1150 = vperm.slane %v1148, 0
        %v1153 = vsel %vm1106, %v1143, 0
        %1155 = vmatpush.msra.mxu0 0.0
        %1156 = vmatpush.msra.mxu0 0.0
        %1157 = vmatpush.msra.mxu0 0.0
        %1158 = vmatpush.msra.mxu0 0.0
        %1159 = vmatpush.msra.mxu0 0.0
        %1160 = vmatpush.msra.mxu0 0.0
        %1161 = vmatpush.msra.mxu0 0.0
        %1162 = vmatpush.msra.mxu0 0.0
        %1163 = vmatpush.msra.mxu0 0.0
        %1164 = vmatpush.msra.mxu0 0.0
        %1165 = vmatpush.msra.mxu0 0.0
        %1166 = vmatpush.msra.mxu0 0.0
        %1167 = vmatpush.msra.mxu0 %v1147
        %1168 = vmatpush.msra.mxu0 %v1146
        %1169 = vmatpush.msra.mxu0 %v1145
        %1170 = vmatpush.msra.mxu0 %v1144
        %1171 = vmatmul.f32.gmra.mxu0 %v1153
        %v1172 = vpop.f32.mrf.mxu0
        %v1173 = vadd.f32 %v1150, %v1172
        %1174 = vdwg.mxu0
        %v1175 = vld [vmem:[%s13] sm:$0xff]
        %v1176 = vld [vmem:[%s13 + $0x8] sm:$0xff]
        %v1177 = vld [vmem:[%s13 + $0x10] sm:$0xff]
        %v1178 = vld [vmem:[%s13 + $0x18] sm:$0xff]
        %1180 = vrot.lane.b32.xlu0 %v1173, 96
        %v1181 = vpop.permute.xlu0 %1180
        %vm1182 = vcmask 130048
        %v1183 = vsel %vm1182, %v1173, 0
        %v1185 = vsel %vm1182, %v1181, 0
        %1187 = vmatpush.xpose.msra.mxu0 0.0
        %1188 = vmatpush.xpose.msra.mxu0 0.0
        %1189 = vmatpush.xpose.msra.mxu0 0.0
        %1190 = vmatpush.xpose.msra.mxu0 0.0
        %1191 = vmatpush.xpose.msra.mxu0 0.0
        %1192 = vmatpush.xpose.msra.mxu0 0.0
        %1193 = vmatpush.xpose.msra.mxu0 0.0
        %1194 = vmatpush.xpose.msra.mxu0 0.0
        %1195 = vmatpush.xpose.msra.mxu0 0.0
        %1196 = vmatpush.xpose.msra.mxu0 0.0
        %1197 = vmatpush.xpose.msra.mxu0 0.0
        %1198 = vmatpush.xpose.msra.mxu0 0.0
        %1199 = vmatpush.xpose.msra.mxu0 0.0
        %1200 = vmatpush.xpose.msra.mxu0 0.0
        %1201 = vmatpush.xpose.msra.mxu0 0.0
        %1202 = vmatpush.xpose.msra.mxu0 %v1185
        %1203 = vmatmul.f32.gmra.mxu0 %v1183
        %v1204 = vpop.f32.mrf.mxu0
        %v1205 = vadd.f32 0.0, %v1204
        %1206 = vdwg.mxu0
        %v1207 = vmul.f32 %v1205, 0.25
        %v1209 = vperm.slane %v1102, 0
        %v1211 = vadd.f32 %v1207, %v1209
        %vm1212 = vcmask 64512
        %v1213 = vsel %vm1212, %v1211, -inf
        %1214 = vmax.xlane.f32.xlu0 %v1213
        %v1215 = vpop.xlane.xlu0 %1214
        %v1216 = vsub.f32 %v1211, %v1215
        %v1217 = vmul.f32 %v1216, 1.442695
        %v1218 = vpow.pop %v1217
        %v1219 = vsel %vm1212, %v1218, 0.0
        %1220 = vadd.xlane.f32.xlu0 %v1219
        %v1221 = vpop.xlane.xlu0 %1220
        %v1222 = vrcp.pop %v1221
        %v1223 = vmul.f32 %v1221, %v1222
        %v1224 = vsub.f32 1.0, %v1223
        %v1225 = vmul.f32 %v1222, %v1224
        %v1226 = vadd.f32 %v1222, %v1225
        %vm1227 = vweird.f32 %v1221
        %vm1228 = vweird.f32 %v1222
        %vm1229 = vmor %vm1227, %vm1228
        %v1230 = vsel %vm1229, %v1222, %v1226
        %v1231 = vand.u32 2147483647, %v1221
        %vm1232 = vcmp.eq.f32.partialorder %v1231, 8.507059e+37
        %v1233 = vand.u32 %v1221, 2147483648
        %v1234 = vor.u32 1.1754944e-38, %v1233
        %v1235 = vsel %vm1232, %v1234, %v1230
        %v1236 = vmul.f32 %v1218, %v1235
        %1237 = vrot.lane.b32.xlu0 %v1173, 64
        %v1238 = vpop.permute.xlu0 %1237
        %v1241 = vsel %vm1212, %v1236, 0
        %1243 = vmatpush.msra.mxu0 0.0
        %1244 = vmatpush.msra.mxu0 0.0
        %1245 = vmatpush.msra.mxu0 0.0
        %1246 = vmatpush.msra.mxu0 0.0
        %1247 = vmatpush.msra.mxu0 0.0
        %1248 = vmatpush.msra.mxu0 0.0
        %1249 = vmatpush.msra.mxu0 0.0
        %1250 = vmatpush.msra.mxu0 0.0
        %1251 = vmatpush.msra.mxu0 0.0
        %1252 = vmatpush.msra.mxu0 0.0
        %1253 = vmatpush.msra.mxu0 0.0
        %1254 = vmatpush.msra.mxu0 0.0
        %1255 = vmatpush.msra.mxu0 0.0
        %1256 = vmatpush.msra.mxu0 0.0
        %1257 = vmatpush.msra.mxu0 0.0
        %1258 = vmatpush.msra.mxu0 %v1238
        %1259 = vmatmul.f32.gmra.mxu0 %v1241
        %v1260 = vpop.f32.mrf.mxu0
        %v1261 = vadd.f32 0.0, %v1260
        %1262 = vdwg.mxu0
        %1263 = vrot.lane.b32.xlu0 %v1173, 112
        %v1264 = vpop.permute.xlu0 %1263
        %1265 = vrot.lane.b32.xlu0 %v1173, 80
        %v1266 = vpop.permute.xlu0 %1265
        %v1267 = vsel %vm1182, %v1264, 0
        %v1269 = vsel %vm1182, %v1266, 0
        %1271 = vmatpush.xpose.msra.mxu0 0.0
        %1272 = vmatpush.xpose.msra.mxu0 0.0
        %1273 = vmatpush.xpose.msra.mxu0 0.0
        %1274 = vmatpush.xpose.msra.mxu0 0.0
        %1275 = vmatpush.xpose.msra.mxu0 0.0
        %1276 = vmatpush.xpose.msra.mxu0 0.0
        %1277 = vmatpush.xpose.msra.mxu0 0.0
        %1278 = vmatpush.xpose.msra.mxu0 0.0
        %1279 = vmatpush.xpose.msra.mxu0 0.0
        %1280 = vmatpush.xpose.msra.mxu0 0.0
        %1281 = vmatpush.xpose.msra.mxu0 0.0
        %1282 = vmatpush.xpose.msra.mxu0 0.0
        %1283 = vmatpush.xpose.msra.mxu0 0.0
        %1284 = vmatpush.xpose.msra.mxu0 0.0
        %1285 = vmatpush.xpose.msra.mxu0 0.0
        %1286 = vmatpush.xpose.msra.mxu0 %v1269
        %1287 = vmatmul.f32.gmra.mxu0 %v1267
        %v1288 = vpop.f32.mrf.mxu0
        %v1289 = vadd.f32 0.0, %v1288
        %1290 = vdwg.mxu0
        %v1291 = vmul.f32 %v1289, 0.25
        %v1292 = vadd.f32 %v1291, %v1209
        %v1293 = vsel %vm1212, %v1292, -inf
        %1294 = vmax.xlane.f32.xlu0 %v1293
        %v1295 = vpop.xlane.xlu0 %1294
        %v1296 = vsub.f32 %v1292, %v1295
        %v1297 = vmul.f32 %v1296, 1.442695
        %v1298 = vpow.pop %v1297
        %v1299 = vsel %vm1212, %v1298, 0.0
        %1300 = vadd.xlane.f32.xlu0 %v1299
        %v1301 = vpop.xlane.xlu0 %1300
        %v1302 = vrcp.pop %v1301
        %v1303 = vmul.f32 %v1301, %v1302
        %v1304 = vsub.f32 1.0, %v1303
        %v1305 = vmul.f32 %v1302, %v1304
        %v1306 = vadd.f32 %v1302, %v1305
        %vm1307 = vweird.f32 %v1301
        %vm1308 = vweird.f32 %v1302
        %vm1309 = vmor %vm1307, %vm1308
        %v1310 = vsel %vm1309, %v1302, %v1306
        %v1311 = vand.u32 2147483647, %v1301
        %vm1312 = vcmp.eq.f32.partialorder %v1311, 8.507059e+37
        %v1313 = vand.u32 %v1301, 2147483648
        %v1314 = vor.u32 1.1754944e-38, %v1313
        %v1315 = vsel %vm1312, %v1314, %v1310
        %v1316 = vmul.f32 %v1298, %v1315
        %1317 = vrot.lane.b32.xlu0 %v1173, 48
        %v1318 = vpop.permute.xlu0 %1317
        %v1321 = vsel %vm1212, %v1316, 0
        %1323 = vmatpush.msra.mxu0 0.0
        %1324 = vmatpush.msra.mxu0 0.0
        %1325 = vmatpush.msra.mxu0 0.0
        %1326 = vmatpush.msra.mxu0 0.0
        %1327 = vmatpush.msra.mxu0 0.0
        %1328 = vmatpush.msra.mxu0 0.0
        %1329 = vmatpush.msra.mxu0 0.0
        %1330 = vmatpush.msra.mxu0 0.0
        %1331 = vmatpush.msra.mxu0 0.0
        %1332 = vmatpush.msra.mxu0 0.0
        %1333 = vmatpush.msra.mxu0 0.0
        %1334 = vmatpush.msra.mxu0 0.0
        %1335 = vmatpush.msra.mxu0 0.0
        %1336 = vmatpush.msra.mxu0 0.0
        %1337 = vmatpush.msra.mxu0 0.0
        %1338 = vmatpush.msra.mxu0 %v1318
        %1339 = vmatmul.f32.gmra.mxu0 %v1321
        %v1340 = vpop.f32.mrf.mxu0
        %v1341 = vadd.f32 0.0, %v1340
        %1342 = vdwg.mxu0
        %v1344 = vsel %vm1182, %v1341, 0
        %1346 = vmatpush.msra.mxu0 0.0
        %1347 = vmatpush.msra.mxu0 0.0
        %1348 = vmatpush.msra.mxu0 0.0
        %1349 = vmatpush.msra.mxu0 0.0
        %1350 = vmatpush.msra.mxu0 0.0
        %1351 = vmatpush.msra.mxu0 0.0
        %1352 = vmatpush.msra.mxu0 0.0
        %1353 = vmatpush.msra.mxu0 0.0
        %1354 = vmatpush.msra.mxu0 0.0
        %1355 = vmatpush.msra.mxu0 0.0
        %1356 = vmatpush.msra.mxu0 0.0
        %1357 = vmatpush.msra.mxu0 0.0
        %1358 = vmatpush.msra.mxu0 0.0
        %1359 = vmatpush.msra.mxu0 0.0
        %1360 = vmatpush.msra.mxu0 %v1178
        %1361 = vmatpush.msra.mxu0 %v1177
        %1362 = vmatmul.f32.gmra.mxu0 %v1344
        %v1363 = vpop.f32.mrf.mxu0
        %v1364 = vadd.f32 0.0, %v1363
        %1365 = vdwg.mxu0
        %v1367 = vsel %vm1182, %v1261, 0
        %1369 = vmatpush.msra.mxu0 0.0
        %1370 = vmatpush.msra.mxu0 0.0
        %1371 = vmatpush.msra.mxu0 0.0
        %1372 = vmatpush.msra.mxu0 0.0
        %1373 = vmatpush.msra.mxu0 0.0
        %1374 = vmatpush.msra.mxu0 0.0
        %1375 = vmatpush.msra.mxu0 0.0
        %1376 = vmatpush.msra.mxu0 0.0
        %1377 = vmatpush.msra.mxu0 0.0
        %1378 = vmatpush.msra.mxu0 0.0
        %1379 = vmatpush.msra.mxu0 0.0
        %1380 = vmatpush.msra.mxu0 0.0
        %1381 = vmatpush.msra.mxu0 0.0
        %1382 = vmatpush.msra.mxu0 0.0
        %1383 = vmatpush.msra.mxu0 %v1176
        %1384 = vmatpush.msra.mxu0 %v1175
        %1385 = vmatmul.f32.gmra.mxu0 %v1367
        %v1386 = vpop.f32.mrf.mxu0
        %v1387 = vadd.f32 %v1364, %v1386
        %1388 = vdwg.mxu0
        %v1389 = vld [vmem:[%s15] sm:$0x1]
        %v1391 = vperm.slane %v1389, 0
        %v1393 = vadd.f32 %v1387, %v1391
        %v1394 = vadd.f32 %v1143, %v1393
        %v1395 = vld [vmem:[%s17] sm:$0x1]
        %v1396 = vld [vmem:[%s19] sm:$0x1]
        %v1397 = vsel %vm1106, %v1394, 0.0
        %1398 = vadd.xlane.f32.xlu0 %v1397
        %v1399 = vpop.xlane.xlu0 %1398
        %v1400 = vmul.f32 %v1399, %v1116
        %v1401 = vsub.f32 %v1394, %v1400
        %v1402 = vmul.f32 %v1401, %v1401
        %v1403 = vsel %vm1106, %v1402, 0.0
        %1404 = vadd.xlane.f32.xlu0 %v1403
        %v1405 = vpop.xlane.xlu0 %1404
        %v1406 = vmul.f32 %v1405, %v1116
        %v1407 = vadd.f32 %v1406, 1e-12
        %v1408 = vrsqrt.pop %v1407
        %v1409 = vmul.f32 %v1408, %v1407
        %v1410 = vmul.f32 %v1409, %v1408
        %v1411 = vmul.f32 0.5, %v1410
        %v1412 = vsub.f32 1.5, %v1411
        %v1413 = vmul.f32 %v1408, %v1412
        %vm1414 = vweird.f32 %v1407
        %vm1415 = vweird.f32 %v1408
        %vm1416 = vmor %vm1414, %vm1415
        %v1417 = vsel %vm1416, %v1408, %v1413
        %v1418 = vmul.f32 %v1401, %v1417
        %v1420 = vperm.slane %v1395, 0
        %v1422 = vmul.f32 %v1418, %v1420
        %v1424 = vperm.slane %v1396, 0
        %v1426 = vadd.f32 %v1422, %v1424
        %v1427 = vld [vmem:[%s21] sm:$0xff]
        %v1428 = vld [vmem:[%s21 + $0x8] sm:$0xff]
        %v1429 = vld [vmem:[%s21 + $0x10] sm:$0xff]
        %v1430 = vld [vmem:[%s21 + $0x18] sm:$0xff]
        %v1431 = vld [vmem:[%s23] sm:$0x1]
        %v1433 = vperm.slane %v1431, 0
        %v1436 = vsel %vm1106, %v1426, 0
        %1438 = vmatpush.msra.mxu0 0.0
        %1439 = vmatpush.msra.mxu0 0.0
        %1440 = vmatpush.msra.mxu0 0.0
        %1441 = vmatpush.msra.mxu0 0.0
        %1442 = vmatpush.msra.mxu0 0.0
        %1443 = vmatpush.msra.mxu0 0.0
        %1444 = vmatpush.msra.mxu0 0.0
        %1445 = vmatpush.msra.mxu0 0.0
        %1446 = vmatpush.msra.mxu0 0.0
        %1447 = vmatpush.msra.mxu0 0.0
        %1448 = vmatpush.msra.mxu0 0.0
        %1449 = vmatpush.msra.mxu0 0.0
        %1450 = vmatpush.msra.mxu0 %v1430
        %1451 = vmatpush.msra.mxu0 %v1429
        %1452 = vmatpush.msra.mxu0 %v1428
        %1453 = vmatpush.msra.mxu0 %v1427
        %1454 = vmatmul.f32.gmra.mxu0 %v1436
        %v1455 = vpop.f32.mrf.mxu0
        %v1456 = vadd.f32 %v1433, %v1455
        %1457 = vdwg.mxu0
        %v1458 = vmul.f32 %v1456, 0.5
        %v1459 = vmul.f32 %v1456, 0.044715
        %v1460 = vmul.f32 %v1459, %v1456
        %v1461 = vmul.f32 %v1460, %v1456
        %v1462 = vadd.f32 %v1456, %v1461
        %v1463 = vmul.f32 %v1462, 0.7978846
        %v1464 = vtanh.pop %v1463
        %v1465 = vadd.f32 %v1464, 1.0
        %v1466 = vmul.f32 %v1458, %v1465
        %v1467 = vld [vmem:[%s25] sm:$0xff]
        %v1468 = vld [vmem:[%s25 + $0x8] sm:$0xff]
        %v1469 = vld [vmem:[%s25 + $0x10] sm:$0xff]
        %v1470 = vld [vmem:[%s25 + $0x18] sm:$0xff]
        %v1471 = vld [vmem:[%s25 + $0x20] sm:$0xff]
        %v1472 = vld [vmem:[%s25 + $0x28] sm:$0xff]
        %v1473 = vld [vmem:[%s25 + $0x30] sm:$0xff]
        %v1474 = vld [vmem:[%s25 + $0x38] sm:$0xff]
        %v1475 = vld [vmem:[%s27] sm:$0x1]
        %v1477 = vperm.slane %v1475, 0
        %vm1479 = vcmask 523264
        %v1481 = vsel %vm1479, %v1466, 0
        %1483 = vmatpush.msra.mxu0 0.0
        %1484 = vmatpush.msra.mxu0 0.0
        %1485 = vmatpush.msra.mxu0 0.0
        %1486 = vmatpush.msra.mxu0 0.0
        %1487 = vmatpush.msra.mxu0 0.0
        %1488 = vmatpush.msra.mxu0 0.0
        %1489 = vmatpush.msra.mxu0 0.0
        %1490 = vmatpush.msra.mxu0 0.0
        %1491 = vmatpush.msra.mxu0 %v1474
        %1492 = vmatpush.msra.mxu0 %v1473
        %1493 = vmatpush.msra.mxu0 %v1472
        %1494 = vmatpush.msra.mxu0 %v1471
        %1495 = vmatpush.msra.mxu0 %v1470
        %1496 = vmatpush.msra.mxu0 %v1469
        %1497 = vmatpush.msra.mxu0 %v1468
        %1498 = vmatpush.msra.mxu0 %v1467
        %1499 = vmatmul.f32.gmra.mxu0 %v1481
        %v1500 = vpop.f32.mrf.mxu0
        %v1501 = vadd.f32 %v1477, %v1500
        %1502 = vdwg.mxu0
        %v1503 = vadd.f32 %v1426, %v1501
        %v1504 = vld [vmem:[%s29] sm:$0x1]
        %v1505 = vld [vmem:[%s31] sm:$0x1]
        %v1506 = vsel %vm1106, %v1503, 0.0
        %1507 = vadd.xlane.f32.xlu0 %v1506
        %v1508 = vpop.xlane.xlu0 %1507
        %v1509 = vmul.f32 %v1508, %v1116
        %v1510 = vsub.f32 %v1503, %v1509
        %v1511 = vmul.f32 %v1510, %v1510
        %v1512 = vsel %vm1106, %v1511, 0.0
        %1513 = vadd.xlane.f32.xlu0 %v1512
        %v1514 = vpop.xlane.xlu0 %1513
        %v1515 = vmul.f32 %v1514, %v1116
        %v1516 = vadd.f32 %v1515, 1e-12
        %v1517 = vrsqrt.pop %v1516
        %v1518 = vmul.f32 %v1517, %v1516
        %v1519 = vmul.f32 %v1518, %v1517
        %v1520 = vmul.f32 0.5, %v1519
        %v1521 = vsub.f32 1.5, %v1520
        %v1522 = vmul.f32 %v1517, %v1521
        %vm1523 = vweird.f32 %v1516
        %vm1524 = vweird.f32 %v1517
        %vm1525 = vmor %vm1523, %vm1524
        %v1526 = vsel %vm1525, %v1517, %v1522
        %v1527 = vmul.f32 %v1510, %v1526
        %v1529 = vperm.slane %v1504, 0
        %v1531 = vmul.f32 %v1527, %v1529
        %v1533 = vperm.slane %v1505, 0
        %v1535 = vadd.f32 %v1531, %v1533
        %v1536 = vld [vmem:[%s33] sm:$0xff]
        %v1537 = vld [vmem:[%s33 + $0x8] sm:$0xff]
        %v1538 = vld [vmem:[%s33 + $0x10] sm:$0xff]
        %v1539 = vld [vmem:[%s33 + $0x18] sm:$0xff]
        %v1540 = vld [vmem:[%s35] sm:$0x1]
        %v1542 = vperm.slane %v1540, 0
        %v1545 = vsel %vm1106, %v1535, 0
        %1547 = vmatpush.msra.mxu0 0.0
        %1548 = vmatpush.msra.mxu0 0.0
        %1549 = vmatpush.msra.mxu0 0.0
        %1550 = vmatpush.msra.mxu0 0.0
        %1551 = vmatpush.msra.mxu0 0.0
        %1552 = vmatpush.msra.mxu0 0.0
        %1553 = vmatpush.msra.mxu0 0.0
        %1554 = vmatpush.msra.mxu0 0.0
        %1555 = vmatpush.msra.mxu0 0.0
        %1556 = vmatpush.msra.mxu0 0.0
        %1557 = vmatpush.msra.mxu0 0.0
        %1558 = vmatpush.msra.mxu0 0.0
        %1559 = vmatpush.msra.mxu0 %v1539
        %1560 = vmatpush.msra.mxu0 %v1538
        %1561 = vmatpush.msra.mxu0 %v1537
        %1562 = vmatpush.msra.mxu0 %v1536
        %1563 = vmatmul.f32.gmra.mxu0 %v1545
        %v1564 = vpop.f32.mrf.mxu0
        %v1565 = vadd.f32 %v1542, %v1564
        %1566 = vdwg.mxu0
        %v1567 = vld [vmem:[%s37] sm:$0xff]
        %v1568 = vld [vmem:[%s37 + $0x8] sm:$0xff]
        %v1569 = vld [vmem:[%s37 + $0x10] sm:$0xff]
        %v1570 = vld [vmem:[%s37 + $0x18] sm:$0xff]
        %1572 = vrot.lane.b32.xlu0 %v1565, 96
        %v1573 = vpop.permute.xlu0 %1572
        %v1574 = vsel %vm1182, %v1565, 0
        %v1576 = vsel %vm1182, %v1573, 0
        %1578 = vmatpush.xpose.msra.mxu0 0.0
        %1579 = vmatpush.xpose.msra.mxu0 0.0
        %1580 = vmatpush.xpose.msra.mxu0 0.0
        %1581 = vmatpush.xpose.msra.mxu0 0.0
        %1582 = vmatpush.xpose.msra.mxu0 0.0
        %1583 = vmatpush.xpose.msra.mxu0 0.0
        %1584 = vmatpush.xpose.msra.mxu0 0.0
        %1585 = vmatpush.xpose.msra.mxu0 0.0
        %1586 = vmatpush.xpose.msra.mxu0 0.0
        %1587 = vmatpush.xpose.msra.mxu0 0.0
        %1588 = vmatpush.xpose.msra.mxu0 0.0
        %1589 = vmatpush.xpose.msra.mxu0 0.0
        %1590 = vmatpush.xpose.msra.mxu0 0.0
        %1591 = vmatpush.xpose.msra.mxu0 0.0
        %1592 = vmatpush.xpose.msra.mxu0 0.0
        %1593 = vmatpush.xpose.msra.mxu0 %v1576
        %1594 = vmatmul.f32.gmra.mxu0 %v1574
        %v1595 = vpop.f32.mrf.mxu0
        %v1596 = vadd.f32 0.0, %v1595
        %1597 = vdwg.mxu0
        %v1598 = vmul.f32 %v1596, 0.25
        %v1599 = vadd.f32 %v1598, %v1209
        %v1600 = vsel %vm1212, %v1599, -inf
        %1601 = vmax.xlane.f32.xlu0 %v1600
        %v1602 = vpop.xlane.xlu0 %1601
        %v1603 = vsub.f32 %v1599, %v1602
        %v1604 = vmul.f32 %v1603, 1.442695
        %v1605 = vpow.pop %v1604
        %v1606 = vsel %vm1212, %v1605, 0.0
        %1607 = vadd.xlane.f32.xlu0 %v1606
        %v1608 = vpop.xlane.xlu0 %1607
        %v1609 = vrcp.pop %v1608
        %v1610 = vmul.f32 %v1608, %v1609
        %v1611 = vsub.f32 1.0, %v1610
        %v1612 = vmul.f32 %v1609, %v1611
        %v1613 = vadd.f32 %v1609, %v1612
        %vm1614 = vweird.f32 %v1608
        %vm1615 = vweird.f32 %v1609
        %vm1616 = vmor %vm1614, %vm1615
        %v1617 = vsel %vm1616, %v1609, %v1613
        %v1618 = vand.u32 2147483647, %v1608
        %vm1619 = vcmp.eq.f32.partialorder %v1618, 8.507059e+37
        %v1620 = vand.u32 %v1608, 2147483648
        %v1621 = vor.u32 1.1754944e-38, %v1620
        %v1622 = vsel %vm1619, %v1621, %v1617
        %v1623 = vmul.f32 %v1605, %v1622
        %1624 = vrot.lane.b32.xlu0 %v1565, 64
        %v1625 = vpop.permute.xlu0 %1624
        %v1628 = vsel %vm1212, %v1623, 0
        %1630 = vmatpush.msra.mxu0 0.0
        %1631 = vmatpush.msra.mxu0 0.0
        %1632 = vmatpush.msra.mxu0 0.0
        %1633 = vmatpush.msra.mxu0 0.0
        %1634 = vmatpush.msra.mxu0 0.0
        %1635 = vmatpush.msra.mxu0 0.0
        %1636 = vmatpush.msra.mxu0 0.0
        %1637 = vmatpush.msra.mxu0 0.0
        %1638 = vmatpush.msra.mxu0 0.0
        %1639 = vmatpush.msra.mxu0 0.0
        %1640 = vmatpush.msra.mxu0 0.0
        %1641 = vmatpush.msra.mxu0 0.0
        %1642 = vmatpush.msra.mxu0 0.0
        %1643 = vmatpush.msra.mxu0 0.0
        %1644 = vmatpush.msra.mxu0 0.0
        %1645 = vmatpush.msra.mxu0 %v1625
        %1646 = vmatmul.f32.gmra.mxu0 %v1628
        %v1647 = vpop.f32.mrf.mxu0
        %v1648 = vadd.f32 0.0, %v1647
        %1649 = vdwg.mxu0
        %1650 = vrot.lane.b32.xlu0 %v1565, 112
        %v1651 = vpop.permute.xlu0 %1650
        %1652 = vrot.lane.b32.xlu0 %v1565, 80
        %v1653 = vpop.permute.xlu0 %1652
        %v1654 = vsel %vm1182, %v1651, 0
        %v1656 = vsel %vm1182, %v1653, 0
        %1658 = vmatpush.xpose.msra.mxu0 0.0
        %1659 = vmatpush.xpose.msra.mxu0 0.0
        %1660 = vmatpush.xpose.msra.mxu0 0.0
        %1661 = vmatpush.xpose.msra.mxu0 0.0
        %1662 = vmatpush.xpose.msra.mxu0 0.0
        %1663 = vmatpush.xpose.msra.mxu0 0.0
        %1664 = vmatpush.xpose.msra.mxu0 0.0
        %1665 = vmatpush.xpose.msra.mxu0 0.0
        %1666 = vmatpush.xpose.msra.mxu0 0.0
        %1667 = vmatpush.xpose.msra.mxu0 0.0
        %1668 = vmatpush.xpose.msra.mxu0 0.0
        %1669 = vmatpush.xpose.msra.mxu0 0.0
        %1670 = vmatpush.xpose.msra.mxu0 0.0
        %1671 = vmatpush.xpose.msra.mxu0 0.0
        %1672 = vmatpush.xpose.msra.mxu0 0.0
        %1673 = vmatpush.xpose.msra.mxu0 %v1656
        %1674 = vmatmul.f32.gmra.mxu0 %v1654
        %v1675 = vpop.f32.mrf.mxu0
        %v1676 = vadd.f32 0.0, %v1675
        %1677 = vdwg.mxu0
        %v1678 = vmul.f32 %v1676, 0.25
        %v1679 = vadd.f32 %v1678, %v1209
        %v1680 = vsel %vm1212, %v1679, -inf
        %1681 = vmax.xlane.f32.xlu0 %v1680
        %v1682 = vpop.xlane.xlu0 %1681
        %v1683 = vsub.f32 %v1679, %v1682
        %v1684 = vmul.f32 %v1683, 1.442695
        %v1685 = vpow.pop %v1684
        %v1686 = vsel %vm1212, %v1685, 0.0
        %1687 = vadd.xlane.f32.xlu0 %v1686
        %v1688 = vpop.xlane.xlu0 %1687
        %v1689 = vrcp.pop %v1688
        %v1690 = vmul.f32 %v1688, %v1689
        %v1691 = vsub.f32 1.0, %v1690
        %v1692 = vmul.f32 %v1689, %v1691
        %v1693 = vadd.f32 %v1689, %v1692
        %vm1694 = vweird.f32 %v1688
        %vm1695 = vweird.f32 %v1689
        %vm1696 = vmor %vm1694, %vm1695
        %v1697 = vsel %vm1696, %v1689, %v1693
        %v1698 = vand.u32 2147483647, %v1688
        %vm1699 = vcmp.eq.f32.partialorder %v1698, 8.507059e+37
        %v1700 = vand.u32 %v1688, 2147483648
        %v1701 = vor.u32 1.1754944e-38, %v1700
        %v1702 = vsel %vm1699, %v1701, %v1697
        %v1703 = vmul.f32 %v1685, %v1702
        %1704 = vrot.lane.b32.xlu0 %v1565, 48
        %v1705 = vpop.permute.xlu0 %1704
        %v1708 = vsel %vm1212, %v1703, 0
        %1710 = vmatpush.msra.mxu0 0.0
        %1711 = vmatpush.msra.mxu0 0.0
        %1712 = vmatpush.msra.mxu0 0.0
        %1713 = vmatpush.msra.mxu0 0.0
        %1714 = vmatpush.msra.mxu0 0.0
        %1715 = vmatpush.msra.mxu0 0.0
        %1716 = vmatpush.msra.mxu0 0.0
        %1717 = vmatpush.msra.mxu0 0.0
        %1718 = vmatpush.msra.mxu0 0.0
        %1719 = vmatpush.msra.mxu0 0.0
        %1720 = vmatpush.msra.mxu0 0.0
        %1721 = vmatpush.msra.mxu0 0.0
        %1722 = vmatpush.msra.mxu0 0.0
        %1723 = vmatpush.msra.mxu0 0.0
        %1724 = vmatpush.msra.mxu0 0.0
        %1725 = vmatpush.msra.mxu0 %v1705
        %1726 = vmatmul.f32.gmra.mxu0 %v1708
        %v1727 = vpop.f32.mrf.mxu0
        %v1728 = vadd.f32 0.0, %v1727
        %1729 = vdwg.mxu0
        %v1731 = vsel %vm1182, %v1728, 0
        %1733 = vmatpush.msra.mxu0 0.0
        %1734 = vmatpush.msra.mxu0 0.0
        %1735 = vmatpush.msra.mxu0 0.0
        %1736 = vmatpush.msra.mxu0 0.0
        %1737 = vmatpush.msra.mxu0 0.0
        %1738 = vmatpush.msra.mxu0 0.0
        %1739 = vmatpush.msra.mxu0 0.0
        %1740 = vmatpush.msra.mxu0 0.0
        %1741 = vmatpush.msra.mxu0 0.0
        %1742 = vmatpush.msra.mxu0 0.0
        %1743 = vmatpush.msra.mxu0 0.0
        %1744 = vmatpush.msra.mxu0 0.0
        %1745 = vmatpush.msra.mxu0 0.0
        %1746 = vmatpush.msra.mxu0 0.0
        %1747 = vmatpush.msra.mxu0 %v1570
        %1748 = vmatpush.msra.mxu0 %v1569
        %1749 = vmatmul.f32.gmra.mxu0 %v1731
        %v1750 = vpop.f32.mrf.mxu0
        %v1751 = vadd.f32 0.0, %v1750
        %1752 = vdwg.mxu0
        %v1754 = vsel %vm1182, %v1648, 0
        %1756 = vmatpush.msra.mxu0 0.0
        %1757 = vmatpush.msra.mxu0 0.0
        %1758 = vmatpush.msra.mxu0 0.0
        %1759 = vmatpush.msra.mxu0 0.0
        %1760 = vmatpush.msra.mxu0 0.0
        %1761 = vmatpush.msra.mxu0 0.0
        %1762 = vmatpush.msra.mxu0 0.0
        %1763 = vmatpush.msra.mxu0 0.0
        %1764 = vmatpush.msra.mxu0 0.0
        %1765 = vmatpush.msra.mxu0 0.0
        %1766 = vmatpush.msra.mxu0 0.0
        %1767 = vmatpush.msra.mxu0 0.0
        %1768 = vmatpush.msra.mxu0 0.0
        %1769 = vmatpush.msra.mxu0 0.0
        %1770 = vmatpush.msra.mxu0 %v1568
        %1771 = vmatpush.msra.mxu0 %v1567
        %1772 = vmatmul.f32.gmra.mxu0 %v1754
        %v1773 = vpop.f32.mrf.mxu0
        %v1774 = vadd.f32 %v1751, %v1773
        %1775 = vdwg.mxu0
        %v1776 = vld [vmem:[%s39] sm:$0x1]
        %v1778 = vperm.slane %v1776, 0
        %v1780 = vadd.f32 %v1774, %v1778
        %v1781 = vadd.f32 %v1535, %v1780
        %v1782 = vld [vmem:[%s41] sm:$0x1]
        %v1783 = vld [vmem:[%s43] sm:$0x1]
        %v1784 = vsel %vm1106, %v1781, 0.0
        %1785 = vadd.xlane.f32.xlu0 %v1784
        %v1786 = vpop.xlane.xlu0 %1785
        %v1787 = vmul.f32 %v1786, %v1116
        %v1788 = vsub.f32 %v1781, %v1787
        %v1789 = vmul.f32 %v1788, %v1788
        %v1790 = vsel %vm1106, %v1789, 0.0
        %1791 = vadd.xlane.f32.xlu0 %v1790
        %v1792 = vpop.xlane.xlu0 %1791
        %v1793 = vmul.f32 %v1792, %v1116
        %v1794 = vadd.f32 %v1793, 1e-12
        %v1795 = vrsqrt.pop %v1794
        %v1796 = vmul.f32 %v1795, %v1794
        %v1797 = vmul.f32 %v1796, %v1795
        %v1798 = vmul.f32 0.5, %v1797
        %v1799 = vsub.f32 1.5, %v1798
        %v1800 = vmul.f32 %v1795, %v1799
        %vm1801 = vweird.f32 %v1794
        %vm1802 = vweird.f32 %v1795
        %vm1803 = vmor %vm1801, %vm1802
        %v1804 = vsel %vm1803, %v1795, %v1800
        %v1805 = vmul.f32 %v1788, %v1804
        %v1807 = vperm.slane %v1782, 0
        %v1809 = vmul.f32 %v1805, %v1807
        %v1811 = vperm.slane %v1783, 0
        %v1813 = vadd.f32 %v1809, %v1811
        %v1814 = vld [vmem:[#allocation8] sm:$0xff]
        %v1815 = vld [vmem:[#allocation8 + $0x8] sm:$0xff]
        %v1816 = vld [vmem:[#allocation8 + $0x10] sm:$0xff]
        %v1817 = vld [vmem:[#allocation8 + $0x18] sm:$0xff]
        %v1818 = vld [vmem:[%s47] sm:$0x1]
        %v1820 = vperm.slane %v1818, 0
        %v1823 = vsel %vm1106, %v1813, 0
        %1825 = vmatpush.msra.mxu0 0.0
        %1826 = vmatpush.msra.mxu0 0.0
        %1827 = vmatpush.msra.mxu0 0.0
        %1828 = vmatpush.msra.mxu0 0.0
        %1829 = vmatpush.msra.mxu0 0.0
        %1830 = vmatpush.msra.mxu0 0.0
        %1831 = vmatpush.msra.mxu0 0.0
        %1832 = vmatpush.msra.mxu0 0.0
        %1833 = vmatpush.msra.mxu0 0.0
        %1834 = vmatpush.msra.mxu0 0.0
        %1835 = vmatpush.msra.mxu0 0.0
        %1836 = vmatpush.msra.mxu0 0.0
        %1837 = vmatpush.msra.mxu0 %v1817
        %1838 = vmatpush.msra.mxu0 %v1816
        %1839 = vmatpush.msra.mxu0 %v1815
        %1840 = vmatpush.msra.mxu0 %v1814
        %1841 = vmatmul.f32.gmra.mxu0 %v1823
        %v1842 = vpop.f32.mrf.mxu0
        %v1843 = vadd.f32 %v1820, %v1842
        %1844 = vdwg.mxu0
        %v1845 = vmul.f32 %v1843, 0.5
        %v1846 = vmul.f32 %v1843, 0.044715
        %v1847 = vmul.f32 %v1846, %v1843
        %v1848 = vmul.f32 %v1847, %v1843
        %v1849 = vadd.f32 %v1843, %v1848
        %v1850 = vmul.f32 %v1849, 0.7978846
        %v1851 = vtanh.pop %v1850
        %v1852 = vadd.f32 %v1851, 1.0
        %v1853 = vmul.f32 %v1845, %v1852
        %v1854 = vld [vmem:[%s49] sm:$0xff]
        %v1855 = vld [vmem:[%s49 + $0x8] sm:$0xff]
        %v1856 = vld [vmem:[%s49 + $0x10] sm:$0xff]
        %v1857 = vld [vmem:[%s49 + $0x18] sm:$0xff]
        %v1858 = vld [vmem:[%s49 + $0x20] sm:$0xff]
        %v1859 = vld [vmem:[%s49 + $0x28] sm:$0xff]
        %v1860 = vld [vmem:[%s49 + $0x30] sm:$0xff]
        %v1861 = vld [vmem:[%s49 + $0x38] sm:$0xff]
        %v1862 = vld [vmem:[%s51] sm:$0x1]
        %v1864 = vperm.slane %v1862, 0
        %v1867 = vsel %vm1479, %v1853, 0
        %1869 = vmatpush.msra.mxu0 0.0
        %1870 = vmatpush.msra.mxu0 0.0
        %1871 = vmatpush.msra.mxu0 0.0
        %1872 = vmatpush.msra.mxu0 0.0
        %1873 = vmatpush.msra.mxu0 0.0
        %1874 = vmatpush.msra.mxu0 0.0
        %1875 = vmatpush.msra.mxu0 0.0
        %1876 = vmatpush.msra.mxu0 0.0
        %1877 = vmatpush.msra.mxu0 %v1861
        %1878 = vmatpush.msra.mxu0 %v1860
        %1879 = vmatpush.msra.mxu0 %v1859
        %1880 = vmatpush.msra.mxu0 %v1858
        %1881 = vmatpush.msra.mxu0 %v1857
        %1882 = vmatpush.msra.mxu0 %v1856
        %1883 = vmatpush.msra.mxu0 %v1855
        %1884 = vmatpush.msra.mxu0 %v1854
        %1885 = vmatmul.f32.gmra.mxu0 %v1867
        %v1886 = vpop.f32.mrf.mxu0
        %v1887 = vadd.f32 %v1864, %v1886
        %1888 = vdwg.mxu0
        %v1889 = vadd.f32 %v1813, %v1887
        %v1890 = vld [vmem:[%s53] sm:$0x1]
        %v1891 = vld [vmem:[%s55] sm:$0x1]
        %v1892 = vsel %vm1106, %v1889, 0.0
        %1893 = vadd.xlane.f32.xlu0 %v1892
        %v1894 = vpop.xlane.xlu0 %1893
        %v1895 = vmul.f32 %v1894, %v1116
        %v1896 = vsub.f32 %v1889, %v1895
        %v1897 = vmul.f32 %v1896, %v1896
        %v1898 = vsel %vm1106, %v1897, 0.0
        %1899 = vadd.xlane.f32.xlu0 %v1898
        %v1900 = vpop.xlane.xlu0 %1899
        %v1901 = vmul.f32 %v1900, %v1116
        %v1902 = vadd.f32 %v1901, 1e-12
        %v1903 = vrsqrt.pop %v1902
        %v1904 = vmul.f32 %v1903, %v1902
        %v1905 = vmul.f32 %v1904, %v1903
        %v1906 = vmul.f32 0.5, %v1905
        %v1907 = vsub.f32 1.5, %v1906
        %v1908 = vmul.f32 %v1903, %v1907
        %vm1909 = vweird.f32 %v1902
        %vm1910 = vweird.f32 %v1903
        %vm1911 = vmor %vm1909, %vm1910
        %v1912 = vsel %vm1911, %v1903, %v1908
        %v1913 = vmul.f32 %v1896, %v1912
        %v1915 = vperm.slane %v1890, 0
        %v1917 = vmul.f32 %v1913, %v1915
        %v1919 = vperm.slane %v1891, 0
        %v1921 = vadd.f32 %v1917, %v1919
        %v1922 = vld [vmem:[#allocation10] sm:$0xff]
        %v1923 = vld [vmem:[#allocation10 + $0x8] sm:$0xff]
        %v1924 = vld [vmem:[#allocation10 + $0x10] sm:$0xff]
        %v1925 = vld [vmem:[#allocation10 + $0x18] sm:$0xff]
        %v1926 = vld [vmem:[%s59] sm:$0x1]
        %v1928 = vsel %vm1106, %v1921, 0
        %1930 = vmatpush.msra.mxu0 0.0
        %1931 = vmatpush.msra.mxu0 0.0
        %1932 = vmatpush.msra.mxu0 0.0
        %1933 = vmatpush.msra.mxu0 0.0
        %1934 = vmatpush.msra.mxu0 0.0
        %1935 = vmatpush.msra.mxu0 0.0
        %1936 = vmatpush.msra.mxu0 0.0
        %1937 = vmatpush.msra.mxu0 0.0
        %1938 = vmatpush.msra.mxu0 0.0
        %1939 = vmatpush.msra.mxu0 0.0
        %1940 = vmatpush.msra.mxu0 0.0
        %1941 = vmatpush.msra.mxu0 0.0
        %1942 = vmatpush.msra.mxu0 %v1925
        %1943 = vmatpush.msra.mxu0 %v1924
        %1944 = vmatpush.msra.mxu0 %v1923
        %1945 = vmatpush.msra.mxu0 %v1922
        %1946 = vmatmul.f32.gmra.mxu0 %v1928
        %v1947 = vpop.f32.mrf.mxu0
        %v1948 = vadd.f32 %v1926, %v1947
        %1949 = vdwg.mxu0
        %v1950 = vtanh.pop %v1948
        %v1951 = vld [vmem:[#allocation11] sm:$0xff]
        %v1952 = vld [vmem:[#allocation11 + $0x8] sm:$0xff]
        %v1953 = vld [vmem:[#allocation11 + $0x10] sm:$0xff]
        %v1954 = vld [vmem:[#allocation11 + $0x18] sm:$0xff]
        %v1955 = vld [vmem:[%s63] sm:$0x1]
        %v1957 = vsel %vm1106, %v1950, 0
        %1959 = vmatpush.msra.mxu0 0.0
        %1960 = vmatpush.msra.mxu0 0.0
        %1961 = vmatpush.msra.mxu0 0.0
        %1962 = vmatpush.msra.mxu0 0.0
        %1963 = vmatpush.msra.mxu0 0.0
        %1964 = vmatpush.msra.mxu0 0.0
        %1965 = vmatpush.msra.mxu0 0.0
        %1966 = vmatpush.msra.mxu0 0.0
        %1967 = vmatpush.msra.mxu0 0.0
        %1968 = vmatpush.msra.mxu0 0.0
        %1969 = vmatpush.msra.mxu0 0.0
        %1970 = vmatpush.msra.mxu0 0.0
        %1971 = vmatpush.msra.mxu0 %v1954
        %1972 = vmatpush.msra.mxu0 %v1953
        %1973 = vmatpush.msra.mxu0 %v1952
        %1974 = vmatpush.msra.mxu0 %v1951
        %1975 = vmatmul.f32.gmra.mxu0 %v1957
        %v1976 = vpop.f32.mrf.mxu0
        %v1977 = vadd.f32 %v1955, %v1976
        %1978 = vdwg.mxu0
        %vm1979 = vcmp.ge.f32.partialorder %v1977, 0.0
        %v1980 = vsub.f32 0.0, %v1977
        %v1981 = vmul.f32 %v1980, 1.442695
        %v1982 = vpow.pop %v1981
        %v1983 = vadd.f32 %v1982, 1.0
        %v1984 = vrcp.pop %v1983
        %v1985 = vmul.f32 %v1983, %v1984
        %v1986 = vsub.f32 1.0, %v1985
        %v1987 = vmul.f32 %v1984, %v1986
        %v1988 = vadd.f32 %v1984, %v1987
        %vm1989 = vweird.f32 %v1983
        %vm1990 = vweird.f32 %v1984
        %vm1991 = vmor %vm1989, %vm1990
        %v1992 = vsel %vm1991, %v1984, %v1988
        %v1993 = vand.u32 2147483647, %v1983
        %vm1994 = vcmp.eq.f32.partialorder %v1993, 8.507059e+37
        %v1995 = vand.u32 %v1983, 2147483648
        %v1996 = vor.u32 1.1754944e-38, %v1995
        %v1997 = vsel %vm1994, %v1996, %v1992
        %v1998 = vmul.f32 1.0, %v1997
        %v1999 = vmul.f32 %v1977, 1.442695
        %v2000 = vpow.pop %v1999
        %v2001 = vadd.f32 %v2000, 1.0
        %v2002 = vrcp.pop %v2001
        %v2003 = vmul.f32 %v2001, %v2002
        %v2004 = vsub.f32 1.0, %v2003
        %v2005 = vmul.f32 %v2002, %v2004
        %v2006 = vadd.f32 %v2002, %v2005
        %vm2007 = vweird.f32 %v2001
        %vm2008 = vweird.f32 %v2002
        %vm2009 = vmor %vm2007, %vm2008
        %v2010 = vsel %vm2009, %v2002, %v2006
        %v2011 = vand.u32 2147483647, %v2001
        %vm2012 = vcmp.eq.f32.partialorder %v2011, 8.507059e+37
        %v2013 = vand.u32 %v2001, 2147483648
        %v2014 = vor.u32 1.1754944e-38, %v2013
        %v2015 = vsel %vm2012, %v2014, %v2010
        %v2016 = vmul.f32 %v2000, %v2015
        %v2017 = vsel %vm1979, %v1998, %v2016
        %2018 = vst [vmem:[%s1101] sm:$0x1] %v2017
        %s2019 = sand.u32 %s777, 1
        %s2020 = scalar_lea.sflag [#allocation4], %s2019
        %s2021 = sand.u32 %s777, 1
        %s2022 = scalar_lea.vmem [#allocation13], %s2021
        // Predicated region
        $region173: #{tpu_custom_call.1} parent=147 // pred_check
          %p2023 = pneg %p787
        $region174: #{tpu_custom_call.1} parent=147 // pred_check_branch
          %2025 = sbr.rel (%p2023) target = $region176
        $region175: #{tpu_custom_call.1} parent=147 // pred_region
          %2027 = vsyncadd %s2020, 0
          %s2028 = scalar_lea.hbm %s65, %s87
          %s2030 = sshll.u32 %s2022, 4
          %s2031 = int_to_ptr.vmem [resolvable:$true] %s2030
          %s2032 = sshll.u32 %s2028, 4
          %s2033 = int_to_ptr.hbm [resolvable:$true] %s2032
          %2035 = dma.vmem_to_hbm [thread:$0]  %s2031, 16, %s2033, %s2020
        $region176: #{tpu_custom_call.1} parent=147 // pred_fallthru
          _
      $region148: #{tpu_custom_call.1} parent=5 // pred_fallthru
        _
      %p2036 = scmp.le.s32.totalorder 2, %s82
      // Predicated region
      $region177: #{tpu_custom_call.1} parent=5 // pred_check
        %p2037 = pneg %p2036
      $region178: #{tpu_custom_call.1} parent=5 // pred_check_branch
        %2039 = sbr.rel (%p2037) target = $region180
      $region179: #{tpu_custom_call.1} parent=5 // pred_region
        %s2040 = ssub.s32 %s82, 2
        // Predicated region
        $region181: #{tpu_custom_call.1} parent=179 // pred_check
          %p2041 = pneg %p793
        $region182: #{tpu_custom_call.1} parent=179 // pred_check_branch
          %2043 = sbr.rel (%p2041) target = $region184
        $region183: #{tpu_custom_call.1} parent=179 // pred_region
          %s2044 = sand.u32 %s778, 1
          %s2045 = scalar_lea.sflag [#allocation4], %s2044
          %s2046 = sand.u32 %s778, 1
          %s2047 = scalar_lea.vmem [#allocation13], %s2046
          %2049 = dma.done %s2045, 16
        $region184: #{tpu_custom_call.1} parent=179 // pred_fallthru
          _
      $region180: #{tpu_custom_call.1} parent=5 // pred_fallthru
        _
    $region6: #{tpu_custom_call.1} parent=1 // loop_footer
      %s86 = sadd.s32 1, %s82
    $region7: #{tpu_custom_call.1} parent=1 // loop_footer_branch
      %81 = sbr.rel target = $region3
    $region8: #{tpu_custom_call.1} parent=1 // loop_exit
      _
    %2050 = vsyncpa [#allocation3], 1
    %s2051 = scalar_lea.sflag [#allocation3], 1
    %2052 = vsyncpa %s2051, 1
    %2053 = vsyncpa [#allocation6], 1
    %s2054 = scalar_lea.sflag [#allocation6], 1
    %2055 = vsyncpa %s2054, 1
    %2056 = vsyncpa [#allocation9], 1
    %2057 = vsyncpa [#allocation12], 1
    %2058 = vsyncpa [#allocation4], 1
    %s2059 = scalar_lea.sflag [#allocation4], 1
    %2060 = vsyncpa %s2059, 1

</llo_original>
